<compile_context>
chip_gen: v5e
topology: v5e:2x2
jax: 0.10.0
libtpu: 0.0.40
codegen_flags: <defaults>
</compile_context>

<pallas_src>
import jax
import jax.numpy as jnp
from jax.experimental import pallas as pl
from jax.experimental.pallas import tpu as pltpu


def _round_up(x: int, m: int) -> int:
    return ((x + m - 1) // m) * m


def _probe_buffered() -> bool:
    """Feature-detect pl.Buffered / BlockSpec(pipeline_mode=...) once."""
    if not hasattr(pl, "Buffered"):
        return False
    try:
        pl.BlockSpec((8, 128), lambda i: (i, 0), pipeline_mode=pl.Buffered(1))
        return True
    except TypeError:
        return False


_HAS_BUFFERED = _probe_buffered()


def _vmem_capacity_bytes() -> int:
    # Capability probe only; fall back to the smallest per-TC VMEM (v7x: 64 MiB).
    try:
        return int(pltpu.get_tpu_info().vmem_capacity_bytes)
    except Exception:  # probe only -- never changes kernel semantics
        return 64 << 20


def mlp_kernel(x_ref, w1_ref, b1_ref, w2_ref, b2_ref, o_ref, acc_ref):
    """Grid = (batch_tiles, k_tiles); the K (input_dim) axis is the reduction.

    acc_ref: f32 VMEM scratch (block_b, H_pad) holding the pre-activation
    hidden tile, resident across the K axis.
    """
    k = pl.program_id(1)

    @pl.when(k == 0)
    def _():
        acc_ref[...] = jnp.zeros_like(acc_ref)

    # Partial first matmul on the MXU, accumulated in f32.
    acc_ref[...] += jnp.dot(
        x_ref[...], w1_ref[...], preferred_element_type=jnp.float32
    )

    @pl.when(k == pl.num_programs(1) - 1)
    def _():
        # Bias + ReLU in f32 on the VPU, second matmul on the MXU, f32 epilogue.
        h = jnp.maximum(acc_ref[...] + b1_ref[...], 0.0)
        y = jnp.dot(
            h.astype(w2_ref.dtype), w2_ref[...], preferred_element_type=jnp.float32
        )
        o_ref[...] = (y + b2_ref[...]).astype(o_ref.dtype)


def _build_pallas_call(*, block_b, block_k, B_pad, K_pad, H_pad, N_pad,
                       out_dtype, vmem_limit_bytes, use_buffered,
                       flops, bytes_accessed):
    k_tiles = K_pad // block_k
    inv_mode = pl.Buffered(1) if use_buffered else None
    # W1 is grid-invariant (block index constant -> DMA'd once) iff k_tiles == 1.
    w1_mode = inv_mode if k_tiles == 1 else None

    def bs(shape, index_map, mode=None):
        if mode is None:
            return pl.BlockSpec(shape, index_map)
        return pl.BlockSpec(shape, index_map, pipeline_mode=mode)

    return pl.pallas_call(
        mlp_kernel,
        out_shape=jax.ShapeDtypeStruct((B_pad, N_pad), out_dtype),
        grid_spec=pltpu.PrefetchScalarGridSpec(
            num_scalar_prefetch=0,
            grid=(B_pad // block_b, k_tiles),
            in_specs=[
                bs((block_b, block_k), lambda i, k: (i, k)),         # x
                bs((block_k, H_pad), lambda i, k: (k, 0), w1_mode),  # W1
                bs((1, H_pad), lambda i, k: (0, 0), inv_mode),       # b1 (f32)
                bs((H_pad, N_pad), lambda i, k: (0, 0), inv_mode),   # W2
                bs((1, N_pad), lambda i, k: (0, 0), inv_mode),       # b2 (f32)
            ],
            out_specs=pl.BlockSpec((block_b, N_pad), lambda i, k: (i, 0)),
            scratch_shapes=[pltpu.VMEM((block_b, H_pad), jnp.float32)],
        ),
        compiler_params=pltpu.CompilerParams(
            # batch axis parallel (megacore), K axis is the reduction.
            dimension_semantics=("parallel", "arbitrary"),
            vmem_limit_bytes=vmem_limit_bytes,
        ),
        cost_estimate=pl.CostEstimate(
            flops=flops, transcendentals=0, bytes_accessed=bytes_accessed),
    )


def fmri2face_forward(x, w1, b1, w2, b2, *, block_b=None, block_k=None,
                      compute_dtype=jnp.bfloat16):
    """x: [B, input_dim]; w1: [input_dim, hidden]; b1: [hidden];
       w2: [hidden, output_dim]; b2: [output_dim] -> [B, output_dim].

    compute_dtype: dtype for x/W1/W2 on the MXU (default bf16). Accumulation,
    bias add and ReLU are always f32. Pass None to keep the input dtype (f32).
    """
    B, K = x.shape
    H = w1.shape[1]
    N = w2.shape[1]
    out_dtype = x.dtype
    cdtype = x.dtype if compute_dtype is None else jnp.dtype(compute_dtype)

    x_sz = jnp.dtype(cdtype).itemsize
    w_sz = x_sz
    o_sz = jnp.dtype(out_dtype).itemsize

    # --- lane-dense / sublane-dense padding ------------------------------
    K_pad = _round_up(K, 128)
    H_pad = _round_up(H, 128)
    N_pad = _round_up(N, 128)
    row_align = max(8, 32 // x_sz)           # 8 rows f32, 16 rows bf16
    B8 = _round_up(B, row_align)

    # --- generation-aware VMEM budget ------------------------------------
    cap = _vmem_capacity_bytes()
    # ~48 MiB usable on a 64 MiB (v7x) part, ~96 MiB on 128 MiB (v5e/v6e).
    budget = min(int(cap * 0.75), cap - (16 << 20))

    inv_buffers = 1 if _HAS_BUFFERED else 2

    def tile_bytes(bb, bk):
        w1_buffers = (1 if _HAS_BUFFERED else 2) if (bk >= K_pad and bk > 0) else 2
        return (2 * bb * bk * x_sz                                   # x tiles
                + w1_buffers * bk * H_pad * w_sz                     # W1 tiles
                + inv_buffers * (H_pad * 4 + H_pad * N_pad * w_sz + N_pad * 4)
                + 2 * bb * N_pad * o_sz                              # out tiles
                + bb * H_pad * 4)                                    # accumulator

    # --- tile selection ---------------------------------------------------
    if block_b is None:
        block_b = min(512, B8)                 # large batch tiles amortize W1
    bb = max(row_align, _round_up(block_b, row_align))

    user_block_k = block_k
    while True:
        if user_block_k is not None:
            bk = min(_round_up(user_block_k, 128), K_pad)
        elif tile_bytes(bb, K_pad) <= budget:
            bk = K_pad                         # W1 fully resident -> DMA'd once
        else:
            fixed = tile_bytes(bb, 0)
            per128 = 2 * bb * 128 * x_sz + 2 * 128 * H_pad * w_sz
            n128 = max(1, (budget - fixed) // per128) if budget > fixed else 1
            bk = max(128, int(min(K_pad, n128 * 128)))
        if user_block_k is not None or tile_bytes(bb, bk) <= budget or bb <= row_align:
            break
        bb = max(row_align, _round_up(bb // 2, row_align))

    block_b, block_k = bb, bk
    B_pad = _round_up(B8, block_b)
    K_pad = _round_up(K_pad, block_k)          # pad a partial K tile with zeros

    # --- pad / cast operands ---------------------------------------------
    def pad2(a, rows, cols):
        pr, pc = rows - a.shape[0], cols - a.shape[1]
        if pr or pc:
            a = jnp.pad(a, ((0, pr), (0, pc)))
        return a

    xp = pad2(x, B_pad, K_pad).astype(cdtype)
    w1p = pad2(w1, K_pad, H_pad).astype(cdtype)
    w2p = pad2(w2, H_pad, N_pad).astype(cdtype)
    b1p = pad2(jnp.reshape(b1, (1, -1)), 1, H_pad).astype(jnp.float32)
    b2p = pad2(jnp.reshape(b2, (1, -1)), 1, N_pad).astype(jnp.float32)

    # --- VMEM limit + cost estimate ---------------------------------------
    actual = tile_bytes(block_b, block_k)
    vmem_limit_bytes = int(min(max(actual + (8 << 20), 32 << 20), cap - (8 << 20)))

    flops = 2 * B_pad * (K_pad * H_pad + H_pad * N_pad)
    bytes_accessed = (xp.size * x_sz + w1p.size * w_sz + w2p.size * w_sz
                      + b1p.size * 4 + b2p.size * 4 + B_pad * N_pad * o_sz)

    common = dict(block_b=block_b, block_k=block_k,
                  B_pad=B_pad, K_pad=K_pad, H_pad=H_pad, N_pad=N_pad,
                  out_dtype=out_dtype, vmem_limit_bytes=vmem_limit_bytes,
                  flops=flops, bytes_accessed=bytes_accessed)

    if _HAS_BUFFERED:
        try:
            out_pad = _build_pallas_call(use_buffered=True, **common)(
                xp, w1p, b1p, w2p, b2p)
        except (NotImplementedError, pltpu.LoweringException):
            # Narrow fallback: only for builds where Buffered(1) constructs but
            # does not lower; genuine errors of other types propagate.
            out_pad = _build_pallas_call(use_buffered=False, **common)(
                xp, w1p, b1p, w2p, b2p)
    else:
        out_pad = _build_pallas_call(use_buffered=False, **common)(
            xp, w1p, b1p, w2p, b2p)

    return out_pad[:B, :N]


if __name__ == "__main__":
    # Small shapes consistent with the module (hidden_dim matches the nn.Module
    # default of 1024); input/output dims deliberately not 128-aligned to
    # exercise the padding path.
    batch, input_dim, hidden_dim, output_dim = 24, 200, 1024, 48

    key = jax.random.PRNGKey(0)
    kx, k1, kb1, k2, kb2 = jax.random.split(key, 5)

    x = jax.random.normal(kx, (batch, input_dim), dtype=jnp.float32)
    w1 = jax.random.normal(k1, (input_dim, hidden_dim), dtype=jnp.float32) * 0.05
    b1 = jax.random.normal(kb1, (hidden_dim,), dtype=jnp.float32) * 0.01
    w2 = jax.random.normal(k2, (hidden_dim, output_dim), dtype=jnp.float32) * 0.05
    b2 = jax.random.normal(kb2, (output_dim,), dtype=jnp.float32) * 0.01

    # Pure-JAX reference of the forward semantics.
    ref = jnp.maximum(x @ w1 + b1[None, :], 0.0) @ w2 + b2[None, :]

    # 1) Default path: bf16 compute, f32 accumulate/bias/ReLU, auto tiles
    #    (W1 fully resident -> single DMA).
    out_bf16 = jax.block_until_ready(fmri2face_forward(x, w1, b1, w2, b2))
    assert out_bf16.shape == (batch, output_dim)
    assert jnp.allclose(out_bf16, ref, atol=5e-2, rtol=5e-2), float(
        jnp.max(jnp.abs(out_bf16 - ref)))

    # 2) f32 compute path with small tiles to exercise the K-reduction
    #    accumulator and batch pipelining (tighter tolerance).
    out_f32 = jax.block_until_ready(
        fmri2face_forward(x, w1, b1, w2, b2, block_b=16, block_k=128,
                          compute_dtype=None))
    assert out_f32.shape == (batch, output_dim)
    assert jnp.allclose(out_f32, ref, atol=1e-2, rtol=1e-2), float(
        jnp.max(jnp.abs(out_f32 - ref)))

    print("KERNEL_OK")
</pallas_src>

<mosaic_0001>
module attributes {stable_mosaic.version = 11 : i64} {
  func.func @mlp_kernel(%arg0: i32, %arg1: i32, %arg2: memref<32x256xbf16, #tpu.memory_space<vmem>>, %arg3: memref<256x1024xbf16, #tpu.memory_space<vmem>>, %arg4: memref<1x1024xf32, #tpu.memory_space<vmem>>, %arg5: memref<1024x128xbf16, #tpu.memory_space<vmem>>, %arg6: memref<1x128xf32, #tpu.memory_space<vmem>>, %arg7: memref<32x128xf32, #tpu.memory_space<vmem>>, %arg8: memref<32x1024xf32, #tpu.memory_space<vmem>>) attributes {dimension_semantics = [#tpu.dimension_semantics<parallel>, #tpu.dimension_semantics<arbitrary>], iteration_bounds = array<i64: 1, 1>, scalar_prefetch = 0 : i64, scratch_operands = 1 : i64, tpu.core_type = #tpu.core_type<tc>, window_params = [{transform_indices = @transform_0, window_bounds = array<i64: 32, 256>}, {pipeline_mode = #tpu.pipeline_mode<synchronous>, transform_indices = @transform_1, window_bounds = array<i64: 256, 1024>}, {pipeline_mode = #tpu.pipeline_mode<synchronous>, transform_indices = @transform_2, window_bounds = array<i64: 1, 1024>}, {pipeline_mode = #tpu.pipeline_mode<synchronous>, transform_indices = @transform_3, window_bounds = array<i64: 1024, 128>}, {pipeline_mode = #tpu.pipeline_mode<synchronous>, transform_indices = @transform_4, window_bounds = array<i64: 1, 128>}, {transform_indices = @transform_5, window_bounds = array<i64: 32, 128>}]} {
    %c0_i32 = arith.constant 0 : i32
    %0 = arith.cmpi eq, %arg1, %c0_i32 : i32
    %1 = arith.extui %0 : i1 to i32
    %c0_i32_0 = arith.constant 0 : i32
    %2 = arith.cmpi ne, %1, %c0_i32_0 : i32
    scf.if %2 {
      %cst_10 = arith.constant 0.000000e+00 : f32
      %12 = vector.broadcast %cst_10 : f32 to vector<32x1024xf32>
      %c0_11 = arith.constant 0 : index
      %c0_12 = arith.constant 0 : index
      %13 = vector.load %arg8[%c0_11, %c0_12] : memref<32x1024xf32, #tpu.memory_space<vmem>>, vector<32x1024xf32>
      tpu.vector_store %arg8[%c0_11, %c0_12], %12 {strides = array<i32>} : memref<32x1024xf32, #tpu.memory_space<vmem>>, vector<32x1024xf32>,
    } else {
    }
    %c0 = arith.constant 0 : index
    %c0_1 = arith.constant 0 : index
    %3 = vector.load %arg8[%c0, %c0_1] : memref<32x1024xf32, #tpu.memory_space<vmem>>, vector<32x1024xf32>
    %c0_2 = arith.constant 0 : index
    %c0_3 = arith.constant 0 : index
    %4 = vector.load %arg2[%c0_2, %c0_3] : memref<32x256xbf16, #tpu.memory_space<vmem>>, vector<32x256xbf16>
    %c0_4 = arith.constant 0 : index
    %c0_5 = arith.constant 0 : index
    %5 = vector.load %arg3[%c0_4, %c0_5] : memref<256x1024xbf16, #tpu.memory_space<vmem>>, vector<256x1024xbf16>
    %cst = arith.constant dense<0.000000e+00> : vector<32x1024xf32>
    %6 = tpu.matmul %4, %5, %cst {dimension_numbers = #tpu.dot_dimension_numbers<[1], [0], [0], [1], [0, 0, 1, 1], [], []>} : vector<32x256xbf16>, vector<256x1024xbf16>, vector<32x1024xf32> -> vector<32x1024xf32>
    %7 = arith.addf %3, %6 : vector<32x1024xf32>
    %c0_6 = arith.constant 0 : index
    %c0_7 = arith.constant 0 : index
    %8 = vector.load %arg8[%c0_6, %c0_7] : memref<32x1024xf32, #tpu.memory_space<vmem>>, vector<32x1024xf32>
    tpu.vector_store %arg8[%c0_6, %c0_7], %7 {strides = array<i32>} : memref<32x1024xf32, #tpu.memory_space<vmem>>, vector<32x1024xf32>,
    %c0_i32_8 = arith.constant 0 : i32
    %9 = arith.cmpi eq, %arg1, %c0_i32_8 : i32
    %10 = arith.extui %9 : i1 to i32
    %c0_i32_9 = arith.constant 0 : i32
    %11 = arith.cmpi ne, %10, %c0_i32_9 : i32
    scf.if %11 {
      %c0_10 = arith.constant 0 : index
      %c0_11 = arith.constant 0 : index
      %12 = vector.load %arg8[%c0_10, %c0_11] : memref<32x1024xf32, #tpu.memory_space<vmem>>, vector<32x1024xf32>
      %c0_12 = arith.constant 0 : index
      %c0_13 = arith.constant 0 : index
      %13 = vector.load %arg4[%c0_12, %c0_13] : memref<1x1024xf32, #tpu.memory_space<vmem>>, vector<1x1024xf32>
      %14 = vector.broadcast %13 : vector<1x1024xf32> to vector<32x1024xf32>
      %15 = arith.addf %12, %14 : vector<32x1024xf32>
      %cst_14 = arith.constant 0.000000e+00 : f32
      %16 = vector.broadcast %cst_14 : f32 to vector<32x1024xf32>
      %17 = arith.maximumf %15, %16 : vector<32x1024xf32>
      %18 = arith.truncf %17 : vector<32x1024xf32> to vector<32x1024xbf16>
      %c0_15 = arith.constant 0 : index
      %c0_16 = arith.constant 0 : index
      %19 = vector.load %arg5[%c0_15, %c0_16] : memref<1024x128xbf16, #tpu.memory_space<vmem>>, vector<1024x128xbf16>
      %cst_17 = arith.constant dense<0.000000e+00> : vector<32x128xf32>
      %20 = tpu.matmul %18, %19, %cst_17 {dimension_numbers = #tpu.dot_dimension_numbers<[1], [0], [0], [1], [0, 0, 1, 1], [], []>} : vector<32x1024xbf16>, vector<1024x128xbf16>, vector<32x128xf32> -> vector<32x128xf32>
      %c0_18 = arith.constant 0 : index
      %c0_19 = arith.constant 0 : index
      %21 = vector.load %arg6[%c0_18, %c0_19] : memref<1x128xf32, #tpu.memory_space<vmem>>, vector<1x128xf32>
      %22 = vector.broadcast %21 : vector<1x128xf32> to vector<32x128xf32>
      %23 = arith.addf %20, %22 : vector<32x128xf32>
      %c0_20 = arith.constant 0 : index
      %c0_21 = arith.constant 0 : index
      %24 = vector.load %arg7[%c0_20, %c0_21] : memref<32x128xf32, #tpu.memory_space<vmem>>, vector<32x128xf32>
      tpu.vector_store %arg7[%c0_20, %c0_21], %23 {strides = array<i32>} : memref<32x128xf32, #tpu.memory_space<vmem>>, vector<32x128xf32>,
    } else {
    }
    return
  }
  func.func @transform_0(%arg0: i32, %arg1: i32) -> (i32, i32) {
    %c0_i32 = arith.constant 0 : i32
    return %arg0, %arg1 : i32, i32
  }
  func.func @transform_1(%arg0: i32, %arg1: i32) -> (i32, i32) {
    %c0_i32 = arith.constant 0 : i32
    %c0_i32_0 = arith.constant 0 : i32
    return %arg1, %c0_i32 : i32, i32
  }
  func.func @transform_2(%arg0: i32, %arg1: i32) -> (i32, i32) {
    %c0_i32 = arith.constant 0 : i32
    %c0_i32_0 = arith.constant 0 : i32
    %c0_i32_1 = arith.constant 0 : i32
    return %c0_i32, %c0_i32_0 : i32, i32
  }
  func.func @transform_3(%arg0: i32, %arg1: i32) -> (i32, i32) {
    %c0_i32 = arith.constant 0 : i32
    %c0_i32_0 = arith.constant 0 : i32
    %c0_i32_1 = arith.constant 0 : i32
    return %c0_i32, %c0_i32_0 : i32, i32
  }
  func.func @transform_4(%arg0: i32, %arg1: i32) -> (i32, i32) {
    %c0_i32 = arith.constant 0 : i32
    %c0_i32_0 = arith.constant 0 : i32
    %c0_i32_1 = arith.constant 0 : i32
    return %c0_i32, %c0_i32_0 : i32, i32
  }
  func.func @transform_5(%arg0: i32, %arg1: i32) -> (i32, i32) {
    %c0_i32 = arith.constant 0 : i32
    %c0_i32_0 = arith.constant 0 : i32
    return %arg0, %c0_i32 : i32, i32
  }
}

</mosaic_0001>

<llo_original>
// kernel: tpu_custom_call.1
$region0: #{tpu_custom_call.1}
  #allocation0 [shape = 'u32[]', space=smem, size = 0x4, offset = 0x4, fixed_abs, tag = 'smem constant byte address 0x4 - core index']
  #allocation1 [shape = 'u32[72,128]{1,0:T(1,128)}', space=vmem, size = 0x9000, scoped, tag = 'internal scratch']
  #allocation2 [shape = 'f32[32,1024]{1,0:T(8,128)}', space=vmem, size = 0x20000, scoped, tag = 'scratch operand']
  %s0 = inlined_call_operand.hbm [shape: bf16[32,256], index: 0, kind: input, shape index: {}]
  %s1 = inlined_call_operand.hbm [shape: bf16[256,1024], index: 1, kind: input, shape index: {}]
  %s2 = inlined_call_operand.hbm [shape: f32[1,1024], index: 2, kind: input, shape index: {}]
  %s3 = inlined_call_operand.hbm [shape: bf16[1024,128], index: 3, kind: input, shape index: {}]
  %s4 = inlined_call_operand.vmem [shape: f32[1,128], index: 4, kind: input, shape index: {}]
  %s5 = inlined_call_operand.hbm [shape: f32[32,128], index: 5, kind: output, shape index: {}]
  %s6 = sld [smem:[#allocation0]]
  $region54: #{tpu_custom_call.1} parent=0
    _
  %s8 = ssub.s32 1, %s6
  %s9 = scalar_select 0, %s8, %s6
  $region1: #{tpu_custom_call.1} parent=0
    #allocation3 [shape = 'u8[16384]{0}', space=vmem, size = 0x4000, scoped, tag = 'input window, operand 0, single buffered']
    #allocation4 [shape = 's32[1]{0}', space=sflag, size = 0x4, scoped, tag = 'scoped memory for tpu_custom_call.1']
    #allocation5 [shape = 's32[1]{0}', space=sflag, size = 0x4, scoped, tag = 'scoped memory for tpu_custom_call.1']
    #allocation6 [shape = 'u8[524288]{0}', space=vmem, size = 0x80000, scoped, tag = 'input window, operand 1, single buffered']
    #allocation7 [shape = 's32[1]{0}', space=sflag, size = 0x4, scoped, tag = 'scoped memory for tpu_custom_call.1']
    #allocation8 [shape = 'u8[4096]{0}', space=vmem, size = 0x1000, scoped, tag = 'input window, operand 2, single buffered']
    #allocation9 [shape = 'u8[262144]{0}', space=vmem, size = 0x40000, scoped, tag = 'input window, operand 3, single buffered']
    #allocation10 [shape = 's32[1]{0}', space=sflag, size = 0x4, scoped, tag = 'scoped memory for tpu_custom_call.1']
    #allocation11 [shape = 'u8[16384]{0}', space=vmem, size = 0x4000, scoped, tag = 'output window, operand 0, single buffered']
    %10 = vsyncpa [#allocation4], 0
    %11 = vsyncpa [#allocation7], 0
    %12 = vsyncpa [#allocation10], 0
    %13 = vsyncpa [#allocation5], 0
    // Predicated region
    $region2: #{tpu_custom_call.1} parent=1 // pred_check
      _
    $region3: #{tpu_custom_call.1} parent=1 // pred_check_branch
      %15 = sbr.rel (0) target = $region5
    $region4: #{tpu_custom_call.1} parent=1 // pred_region
      %17 = vsyncadd [#allocation4], 0
      %s18 = sshll.u32 %s0, 4
      %s19 = int_to_ptr.hbm [resolvable:$true] %s18
      %s20 = sshll.u32 [#allocation3], 4
      %s21 = int_to_ptr.vmem [resolvable:$true] %s20
      %26 = dma.hbm_to_vmem [thread:$0]  %s19, 512, %s21, [#allocation4], 128, 128, 8
    $region5: #{tpu_custom_call.1} parent=1 // pred_fallthru
      _
    // Predicated region
    $region6: #{tpu_custom_call.1} parent=1 // pred_check
      _
    $region7: #{tpu_custom_call.1} parent=1 // pred_check_branch
      %28 = sbr.rel (0) target = $region9
    $region8: #{tpu_custom_call.1} parent=1 // pred_region
      %30 = vsyncadd [#allocation7], 0
      %s31 = sshll.u32 %s1, 4
      %s32 = int_to_ptr.hbm [resolvable:$true] %s31
      %s33 = sshll.u32 [#allocation6], 4
      %s34 = int_to_ptr.vmem [resolvable:$true] %s33
      %39 = dma.hbm_to_vmem [thread:$0]  %s32, 16384, %s34, [#allocation7], 512, 512, 32
    $region9: #{tpu_custom_call.1} parent=1 // pred_fallthru
      _
    // Predicated region
    $region10: #{tpu_custom_call.1} parent=1 // pred_check
      _
    $region11: #{tpu_custom_call.1} parent=1 // pred_check_branch
      %41 = sbr.rel (0) target = $region13
    $region12: #{tpu_custom_call.1} parent=1 // pred_region
      %43 = vsyncadd [#allocation7], 0
      %s45 = sshll.u32 %s2, 4
      %s46 = int_to_ptr.hbm [resolvable:$true] %s45
      %s47 = sshll.u32 [#allocation8], 4
      %s48 = int_to_ptr.vmem [resolvable:$true] %s47
      %50 = dma.hbm_to_vmem [thread:$0]  %s46, 128, %s48, [#allocation7]
    $region13: #{tpu_custom_call.1} parent=1 // pred_fallthru
      _
    // Predicated region
    $region14: #{tpu_custom_call.1} parent=1 // pred_check
      _
    $region15: #{tpu_custom_call.1} parent=1 // pred_check_branch
      %52 = sbr.rel (0) target = $region17
    $region16: #{tpu_custom_call.1} parent=1 // pred_region
      %54 = vsyncadd [#allocation10], 0
      %s55 = sshll.u32 %s3, 4
      %s56 = int_to_ptr.hbm [resolvable:$true] %s55
      %s57 = sshll.u32 [#allocation9], 4
      %s58 = int_to_ptr.vmem [resolvable:$true] %s57
      %63 = dma.hbm_to_vmem [thread:$0]  %s56, 8192, %s58, [#allocation10], 64, 64, 4
    $region17: #{tpu_custom_call.1} parent=1 // pred_fallthru
      _
    // Predicated region
    $region18: #{tpu_custom_call.1} parent=1 // pred_check
      _
    $region19: #{tpu_custom_call.1} parent=1 // pred_check_branch
      %65 = sbr.rel (0) target = $region21
    $region20: #{tpu_custom_call.1} parent=1 // pred_region
      _
    $region21: #{tpu_custom_call.1} parent=1 // pred_fallthru
      _
    // Predicated region
    $region22: #{tpu_custom_call.1} parent=1 // pred_check
      _
    $region23: #{tpu_custom_call.1} parent=1 // pred_check_branch
      %67 = sbr.rel (0) target = $region25
    $region24: #{tpu_custom_call.1} parent=1 // pred_region
      %69 = dma.done [#allocation4], 512
    $region25: #{tpu_custom_call.1} parent=1 // pred_fallthru
      _
    // Predicated region
    $region26: #{tpu_custom_call.1} parent=1 // pred_check
      _
    $region27: #{tpu_custom_call.1} parent=1 // pred_check_branch
      %71 = sbr.rel (0) target = $region29
    $region28: #{tpu_custom_call.1} parent=1 // pred_region
      %73 = dma.done [#allocation7], 16384
    $region29: #{tpu_custom_call.1} parent=1 // pred_fallthru
      _
    // Predicated region
    $region30: #{tpu_custom_call.1} parent=1 // pred_check
      _
    $region31: #{tpu_custom_call.1} parent=1 // pred_check_branch
      %75 = sbr.rel (0) target = $region33
    $region32: #{tpu_custom_call.1} parent=1 // pred_region
      %77 = dma.done [#allocation7], 128
    $region33: #{tpu_custom_call.1} parent=1 // pred_fallthru
      _
    // Predicated region
    $region34: #{tpu_custom_call.1} parent=1 // pred_check
      _
    $region35: #{tpu_custom_call.1} parent=1 // pred_check_branch
      %79 = sbr.rel (0) target = $region37
    $region36: #{tpu_custom_call.1} parent=1 // pred_region
      %81 = dma.done [#allocation10], 8192
    $region37: #{tpu_custom_call.1} parent=1 // pred_fallthru
      _
    %p82 = scmp.eq.s32.totalorder 0, 0
    // Predicated region
    $region38: #{tpu_custom_call.1} parent=1 // pred_check
      %p83 = pneg %p82
    $region39: #{tpu_custom_call.1} parent=1 // pred_check_branch
      %85 = sbr.rel (%p83) target = $region41
    $region40: #{tpu_custom_call.1} parent=1 // pred_region
      %86 = vst [vmem:[#allocation2] sm:$0xff] 0.0
      %87 = vst [vmem:[#allocation2 + $0x8] sm:$0xff] 0.0
      %88 = vst [vmem:[#allocation2 + $0x10] sm:$0xff] 0.0
      %89 = vst [vmem:[#allocation2 + $0x18] sm:$0xff] 0.0
      %90 = vst [vmem:[#allocation2 + $0x20] sm:$0xff] 0.0
      %91 = vst [vmem:[#allocation2 + $0x28] sm:$0xff] 0.0
      %92 = vst [vmem:[#allocation2 + $0x30] sm:$0xff] 0.0
      %93 = vst [vmem:[#allocation2 + $0x38] sm:$0xff] 0.0
      %94 = vst [vmem:[#allocation2 + $0x40] sm:$0xff] 0.0
      %95 = vst [vmem:[#allocation2 + $0x48] sm:$0xff] 0.0
      %96 = vst [vmem:[#allocation2 + $0x50] sm:$0xff] 0.0
      %97 = vst [vmem:[#allocation2 + $0x58] sm:$0xff] 0.0
      %98 = vst [vmem:[#allocation2 + $0x60] sm:$0xff] 0.0
      %99 = vst [vmem:[#allocation2 + $0x68] sm:$0xff] 0.0
      %100 = vst [vmem:[#allocation2 + $0x70] sm:$0xff] 0.0
      %101 = vst [vmem:[#allocation2 + $0x78] sm:$0xff] 0.0
      %102 = vst [vmem:[#allocation2 + $0x80] sm:$0xff] 0.0
      %103 = vst [vmem:[#allocation2 + $0x88] sm:$0xff] 0.0
      %104 = vst [vmem:[#allocation2 + $0x90] sm:$0xff] 0.0
      %105 = vst [vmem:[#allocation2 + $0x98] sm:$0xff] 0.0
      %106 = vst [vmem:[#allocation2 + $0xa0] sm:$0xff] 0.0
      %107 = vst [vmem:[#allocation2 + $0xa8] sm:$0xff] 0.0
      %108 = vst [vmem:[#allocation2 + $0xb0] sm:$0xff] 0.0
      %109 = vst [vmem:[#allocation2 + $0xb8] sm:$0xff] 0.0
      %110 = vst [vmem:[#allocation2 + $0xc0] sm:$0xff] 0.0
      %111 = vst [vmem:[#allocation2 + $0xc8] sm:$0xff] 0.0
      %112 = vst [vmem:[#allocation2 + $0xd0] sm:$0xff] 0.0
      %113 = vst [vmem:[#allocation2 + $0xd8] sm:$0xff] 0.0
      %114 = vst [vmem:[#allocation2 + $0xe0] sm:$0xff] 0.0
      %115 = vst [vmem:[#allocation2 + $0xe8] sm:$0xff] 0.0
      %116 = vst [vmem:[#allocation2 + $0xf0] sm:$0xff] 0.0
      %117 = vst [vmem:[#allocation2 + $0xf8] sm:$0xff] 0.0
    $region41: #{tpu_custom_call.1} parent=1 // pred_fallthru
      _
    %v118 = vld [vmem:[#allocation2] sm:$0xff]
    %v119 = vld [vmem:[#allocation2 + $0x8] sm:$0xff]
    %v120 = vld [vmem:[#allocation2 + $0x10] sm:$0xff]
    %v121 = vld [vmem:[#allocation2 + $0x18] sm:$0xff]
    %v122 = vld [vmem:[#allocation2 + $0x20] sm:$0xff]
    %v123 = vld [vmem:[#allocation2 + $0x28] sm:$0xff]
    %v124 = vld [vmem:[#allocation2 + $0x30] sm:$0xff]
    %v125 = vld [vmem:[#allocation2 + $0x38] sm:$0xff]
    %v126 = vld [vmem:[#allocation2 + $0x40] sm:$0xff]
    %v127 = vld [vmem:[#allocation2 + $0x48] sm:$0xff]
    %v128 = vld [vmem:[#allocation2 + $0x50] sm:$0xff]
    %v129 = vld [vmem:[#allocation2 + $0x58] sm:$0xff]
    %v130 = vld [vmem:[#allocation2 + $0x60] sm:$0xff]
    %v131 = vld [vmem:[#allocation2 + $0x68] sm:$0xff]
    %v132 = vld [vmem:[#allocation2 + $0x70] sm:$0xff]
    %v133 = vld [vmem:[#allocation2 + $0x78] sm:$0xff]
    %v134 = vld [vmem:[#allocation2 + $0x80] sm:$0xff]
    %v135 = vld [vmem:[#allocation2 + $0x88] sm:$0xff]
    %v136 = vld [vmem:[#allocation2 + $0x90] sm:$0xff]
    %v137 = vld [vmem:[#allocation2 + $0x98] sm:$0xff]
    %v138 = vld [vmem:[#allocation2 + $0xa0] sm:$0xff]
    %v139 = vld [vmem:[#allocation2 + $0xa8] sm:$0xff]
    %v140 = vld [vmem:[#allocation2 + $0xb0] sm:$0xff]
    %v141 = vld [vmem:[#allocation2 + $0xb8] sm:$0xff]
    %v142 = vld [vmem:[#allocation2 + $0xc0] sm:$0xff]
    %v143 = vld [vmem:[#allocation2 + $0xc8] sm:$0xff]
    %v144 = vld [vmem:[#allocation2 + $0xd0] sm:$0xff]
    %v145 = vld [vmem:[#allocation2 + $0xd8] sm:$0xff]
    %v146 = vld [vmem:[#allocation2 + $0xe0] sm:$0xff]
    %v147 = vld [vmem:[#allocation2 + $0xe8] sm:$0xff]
    %v148 = vld [vmem:[#allocation2 + $0xf0] sm:$0xff]
    %v149 = vld [vmem:[#allocation2 + $0xf8] sm:$0xff]
    %v150 = vld [vmem:[#allocation3] sm:$0xff]
    %v151 = vld [vmem:[#allocation3 + $0x8] sm:$0xff]
    %v152 = vld [vmem:[#allocation3 + $0x10] sm:$0xff]
    %v153 = vld [vmem:[#allocation3 + $0x18] sm:$0xff]
    %v154 = vld [vmem:[#allocation6] sm:$0xff]
    %v155 = vld [vmem:[#allocation6 + $0x8] sm:$0xff]
    %v156 = vld [vmem:[#allocation6 + $0x10] sm:$0xff]
    %v157 = vld [vmem:[#allocation6 + $0x18] sm:$0xff]
    %v158 = vld [vmem:[#allocation6 + $0x20] sm:$0xff]
    %v159 = vld [vmem:[#allocation6 + $0x28] sm:$0xff]
    %v160 = vld [vmem:[#allocation6 + $0x30] sm:$0xff]
    %v161 = vld [vmem:[#allocation6 + $0x38] sm:$0xff]
    %v162 = vld [vmem:[#allocation6 + $0x40] sm:$0xff]
    %v163 = vld [vmem:[#allocation6 + $0x48] sm:$0xff]
    %v164 = vld [vmem:[#allocation6 + $0x50] sm:$0xff]
    %v165 = vld [vmem:[#allocation6 + $0x58] sm:$0xff]
    %v166 = vld [vmem:[#allocation6 + $0x60] sm:$0xff]
    %v167 = vld [vmem:[#allocation6 + $0x68] sm:$0xff]
    %v168 = vld [vmem:[#allocation6 + $0x70] sm:$0xff]
    %v169 = vld [vmem:[#allocation6 + $0x78] sm:$0xff]
    %v170 = vld [vmem:[#allocation6 + $0x80] sm:$0xff]
    %v171 = vld [vmem:[#allocation6 + $0x88] sm:$0xff]
    %v172 = vld [vmem:[#allocation6 + $0x90] sm:$0xff]
    %v173 = vld [vmem:[#allocation6 + $0x98] sm:$0xff]
    %v174 = vld [vmem:[#allocation6 + $0xa0] sm:$0xff]
    %v175 = vld [vmem:[#allocation6 + $0xa8] sm:$0xff]
    %v176 = vld [vmem:[#allocation6 + $0xb0] sm:$0xff]
    %v177 = vld [vmem:[#allocation6 + $0xb8] sm:$0xff]
    %v178 = vld [vmem:[#allocation6 + $0xc0] sm:$0xff]
    %v179 = vld [vmem:[#allocation6 + $0xc8] sm:$0xff]
    %v180 = vld [vmem:[#allocation6 + $0xd0] sm:$0xff]
    %v181 = vld [vmem:[#allocation6 + $0xd8] sm:$0xff]
    %v182 = vld [vmem:[#allocation6 + $0xe0] sm:$0xff]
    %v183 = vld [vmem:[#allocation6 + $0xe8] sm:$0xff]
    %v184 = vld [vmem:[#allocation6 + $0xf0] sm:$0xff]
    %v185 = vld [vmem:[#allocation6 + $0xf8] sm:$0xff]
    %v186 = vld [vmem:[#allocation6 + $0x100] sm:$0xff]
    %v187 = vld [vmem:[#allocation6 + $0x108] sm:$0xff]
    %v188 = vld [vmem:[#allocation6 + $0x110] sm:$0xff]
    %v189 = vld [vmem:[#allocation6 + $0x118] sm:$0xff]
    %v190 = vld [vmem:[#allocation6 + $0x120] sm:$0xff]
    %v191 = vld [vmem:[#allocation6 + $0x128] sm:$0xff]
    %v192 = vld [vmem:[#allocation6 + $0x130] sm:$0xff]
    %v193 = vld [vmem:[#allocation6 + $0x138] sm:$0xff]
    %v194 = vld [vmem:[#allocation6 + $0x140] sm:$0xff]
    %v195 = vld [vmem:[#allocation6 + $0x148] sm:$0xff]
    %v196 = vld [vmem:[#allocation6 + $0x150] sm:$0xff]
    %v197 = vld [vmem:[#allocation6 + $0x158] sm:$0xff]
    %v198 = vld [vmem:[#allocation6 + $0x160] sm:$0xff]
    %v199 = vld [vmem:[#allocation6 + $0x168] sm:$0xff]
    %v200 = vld [vmem:[#allocation6 + $0x170] sm:$0xff]
    %v201 = vld [vmem:[#allocation6 + $0x178] sm:$0xff]
    %v202 = vld [vmem:[#allocation6 + $0x180] sm:$0xff]
    %v203 = vld [vmem:[#allocation6 + $0x188] sm:$0xff]
    %v204 = vld [vmem:[#allocation6 + $0x190] sm:$0xff]
    %v205 = vld [vmem:[#allocation6 + $0x198] sm:$0xff]
    %v206 = vld [vmem:[#allocation6 + $0x1a0] sm:$0xff]
    %v207 = vld [vmem:[#allocation6 + $0x1a8] sm:$0xff]
    %v208 = vld [vmem:[#allocation6 + $0x1b0] sm:$0xff]
    %v209 = vld [vmem:[#allocation6 + $0x1b8] sm:$0xff]
    %v210 = vld [vmem:[#allocation6 + $0x1c0] sm:$0xff]
    %v211 = vld [vmem:[#allocation6 + $0x1c8] sm:$0xff]
    %v212 = vld [vmem:[#allocation6 + $0x1d0] sm:$0xff]
    %v213 = vld [vmem:[#allocation6 + $0x1d8] sm:$0xff]
    %v214 = vld [vmem:[#allocation6 + $0x1e0] sm:$0xff]
    %v215 = vld [vmem:[#allocation6 + $0x1e8] sm:$0xff]
    %v216 = vld [vmem:[#allocation6 + $0x1f0] sm:$0xff]
    %v217 = vld [vmem:[#allocation6 + $0x1f8] sm:$0xff]
    %v218 = vld [vmem:[#allocation6 + $0x200] sm:$0xff]
    %v219 = vld [vmem:[#allocation6 + $0x208] sm:$0xff]
    %v220 = vld [vmem:[#allocation6 + $0x210] sm:$0xff]
    %v221 = vld [vmem:[#allocation6 + $0x218] sm:$0xff]
    %v222 = vld [vmem:[#allocation6 + $0x220] sm:$0xff]
    %v223 = vld [vmem:[#allocation6 + $0x228] sm:$0xff]
    %v224 = vld [vmem:[#allocation6 + $0x230] sm:$0xff]
    %v225 = vld [vmem:[#allocation6 + $0x238] sm:$0xff]
    %v226 = vld [vmem:[#allocation6 + $0x240] sm:$0xff]
    %v227 = vld [vmem:[#allocation6 + $0x248] sm:$0xff]
    %v228 = vld [vmem:[#allocation6 + $0x250] sm:$0xff]
    %v229 = vld [vmem:[#allocation6 + $0x258] sm:$0xff]
    %v230 = vld [vmem:[#allocation6 + $0x260] sm:$0xff]
    %v231 = vld [vmem:[#allocation6 + $0x268] sm:$0xff]
    %v232 = vld [vmem:[#allocation6 + $0x270] sm:$0xff]
    %v233 = vld [vmem:[#allocation6 + $0x278] sm:$0xff]
    %v234 = vld [vmem:[#allocation6 + $0x280] sm:$0xff]
    %v235 = vld [vmem:[#allocation6 + $0x288] sm:$0xff]
    %v236 = vld [vmem:[#allocation6 + $0x290] sm:$0xff]
    %v237 = vld [vmem:[#allocation6 + $0x298] sm:$0xff]
    %v238 = vld [vmem:[#allocation6 + $0x2a0] sm:$0xff]
    %v239 = vld [vmem:[#allocation6 + $0x2a8] sm:$0xff]
    %v240 = vld [vmem:[#allocation6 + $0x2b0] sm:$0xff]
    %v241 = vld [vmem:[#allocation6 + $0x2b8] sm:$0xff]
    %v242 = vld [vmem:[#allocation6 + $0x2c0] sm:$0xff]
    %v243 = vld [vmem:[#allocation6 + $0x2c8] sm:$0xff]
    %v244 = vld [vmem:[#allocation6 + $0x2d0] sm:$0xff]
    %v245 = vld [vmem:[#allocation6 + $0x2d8] sm:$0xff]
    %v246 = vld [vmem:[#allocation6 + $0x2e0] sm:$0xff]
    %v247 = vld [vmem:[#allocation6 + $0x2e8] sm:$0xff]
    %v248 = vld [vmem:[#allocation6 + $0x2f0] sm:$0xff]
    %v249 = vld [vmem:[#allocation6 + $0x2f8] sm:$0xff]
    %v250 = vld [vmem:[#allocation6 + $0x300] sm:$0xff]
    %v251 = vld [vmem:[#allocation6 + $0x308] sm:$0xff]
    %v252 = vld [vmem:[#allocation6 + $0x310] sm:$0xff]
    %v253 = vld [vmem:[#allocation6 + $0x318] sm:$0xff]
    %v254 = vld [vmem:[#allocation6 + $0x320] sm:$0xff]
    %v255 = vld [vmem:[#allocation6 + $0x328] sm:$0xff]
    %v256 = vld [vmem:[#allocation6 + $0x330] sm:$0xff]
    %v257 = vld [vmem:[#allocation6 + $0x338] sm:$0xff]
    %v258 = vld [vmem:[#allocation6 + $0x340] sm:$0xff]
    %v259 = vld [vmem:[#allocation6 + $0x348] sm:$0xff]
    %v260 = vld [vmem:[#allocation6 + $0x350] sm:$0xff]
    %v261 = vld [vmem:[#allocation6 + $0x358] sm:$0xff]
    %v262 = vld [vmem:[#allocation6 + $0x360] sm:$0xff]
    %v263 = vld [vmem:[#allocation6 + $0x368] sm:$0xff]
    %v264 = vld [vmem:[#allocation6 + $0x370] sm:$0xff]
    %v265 = vld [vmem:[#allocation6 + $0x378] sm:$0xff]
    %v266 = vld [vmem:[#allocation6 + $0x380] sm:$0xff]
    %v267 = vld [vmem:[#allocation6 + $0x388] sm:$0xff]
    %v268 = vld [vmem:[#allocation6 + $0x390] sm:$0xff]
    %v269 = vld [vmem:[#allocation6 + $0x398] sm:$0xff]
    %v270 = vld [vmem:[#allocation6 + $0x3a0] sm:$0xff]
    %v271 = vld [vmem:[#allocation6 + $0x3a8] sm:$0xff]
    %v272 = vld [vmem:[#allocation6 + $0x3b0] sm:$0xff]
    %v273 = vld [vmem:[#allocation6 + $0x3b8] sm:$0xff]
    %v274 = vld [vmem:[#allocation6 + $0x3c0] sm:$0xff]
    %v275 = vld [vmem:[#allocation6 + $0x3c8] sm:$0xff]
    %v276 = vld [vmem:[#allocation6 + $0x3d0] sm:$0xff]
    %v277 = vld [vmem:[#allocation6 + $0x3d8] sm:$0xff]
    %v278 = vld [vmem:[#allocation6 + $0x3e0] sm:$0xff]
    %v279 = vld [vmem:[#allocation6 + $0x3e8] sm:$0xff]
    %v280 = vld [vmem:[#allocation6 + $0x3f0] sm:$0xff]
    %v281 = vld [vmem:[#allocation6 + $0x3f8] sm:$0xff]
    %v286 = vunpack.c.l.b16 %v150
    %v287 = vunpack.c.h.b16 %v150
    %v288 = vunpack.c.l.b16 %v151
    %v289 = vunpack.c.h.b16 %v151
    %v290 = vunpack.c.l.b16 %v152
    %v291 = vunpack.c.h.b16 %v152
    %v292 = vunpack.c.l.b16 %v153
    %v293 = vunpack.c.h.b16 %v153
    %v294 = vpack.c.b16 %v288, %v286
    %v295 = vpack.c.b16 %v289, %v287
    %v296 = vpack.c.b16 %v292, %v290
    %v297 = vpack.c.b16 %v293, %v291
    %v430 = vunpack.c.l.b16 %v154
    %v431 = vunpack.c.h.b16 %v154
    %v432 = vunpack.c.l.b16 %v155
    %v433 = vunpack.c.h.b16 %v155
    %v434 = vunpack.c.l.b16 %v156
    %v435 = vunpack.c.h.b16 %v156
    %v436 = vunpack.c.l.b16 %v157
    %v437 = vunpack.c.h.b16 %v157
    %v438 = vunpack.c.l.b16 %v158
    %v439 = vunpack.c.h.b16 %v158
    %v440 = vunpack.c.l.b16 %v159
    %v441 = vunpack.c.h.b16 %v159
    %v442 = vunpack.c.l.b16 %v160
    %v443 = vunpack.c.h.b16 %v160
    %v444 = vunpack.c.l.b16 %v161
    %v445 = vunpack.c.h.b16 %v161
    %v446 = vunpack.c.l.b16 %v162
    %v447 = vunpack.c.h.b16 %v162
    %v448 = vunpack.c.l.b16 %v163
    %v449 = vunpack.c.h.b16 %v163
    %v450 = vunpack.c.l.b16 %v164
    %v451 = vunpack.c.h.b16 %v164
    %v452 = vunpack.c.l.b16 %v165
    %v453 = vunpack.c.h.b16 %v165
    %v454 = vunpack.c.l.b16 %v166
    %v455 = vunpack.c.h.b16 %v166
    %v456 = vunpack.c.l.b16 %v167
    %v457 = vunpack.c.h.b16 %v167
    %v458 = vunpack.c.l.b16 %v168
    %v459 = vunpack.c.h.b16 %v168
    %v460 = vunpack.c.l.b16 %v169
    %v461 = vunpack.c.h.b16 %v169
    %v462 = vunpack.c.l.b16 %v170
    %v463 = vunpack.c.h.b16 %v170
    %v464 = vunpack.c.l.b16 %v171
    %v465 = vunpack.c.h.b16 %v171
    %v466 = vunpack.c.l.b16 %v172
    %v467 = vunpack.c.h.b16 %v172
    %v468 = vunpack.c.l.b16 %v173
    %v469 = vunpack.c.h.b16 %v173
    %v470 = vunpack.c.l.b16 %v174
    %v471 = vunpack.c.h.b16 %v174
    %v472 = vunpack.c.l.b16 %v175
    %v473 = vunpack.c.h.b16 %v175
    %v474 = vunpack.c.l.b16 %v176
    %v475 = vunpack.c.h.b16 %v176
    %v476 = vunpack.c.l.b16 %v177
    %v477 = vunpack.c.h.b16 %v177
    %v478 = vunpack.c.l.b16 %v178
    %v479 = vunpack.c.h.b16 %v178
    %v480 = vunpack.c.l.b16 %v179
    %v481 = vunpack.c.h.b16 %v179
    %v482 = vunpack.c.l.b16 %v180
    %v483 = vunpack.c.h.b16 %v180
    %v484 = vunpack.c.l.b16 %v181
    %v485 = vunpack.c.h.b16 %v181
    %v486 = vunpack.c.l.b16 %v182
    %v487 = vunpack.c.h.b16 %v182
    %v488 = vunpack.c.l.b16 %v183
    %v489 = vunpack.c.h.b16 %v183
    %v490 = vunpack.c.l.b16 %v184
    %v491 = vunpack.c.h.b16 %v184
    %v492 = vunpack.c.l.b16 %v185
    %v493 = vunpack.c.h.b16 %v185
    %v494 = vunpack.c.l.b16 %v186
    %v495 = vunpack.c.h.b16 %v186
    %v496 = vunpack.c.l.b16 %v187
    %v497 = vunpack.c.h.b16 %v187
    %v498 = vunpack.c.l.b16 %v188
    %v499 = vunpack.c.h.b16 %v188
    %v500 = vunpack.c.l.b16 %v189
    %v501 = vunpack.c.h.b16 %v189
    %v502 = vunpack.c.l.b16 %v190
    %v503 = vunpack.c.h.b16 %v190
    %v504 = vunpack.c.l.b16 %v191
    %v505 = vunpack.c.h.b16 %v191
    %v506 = vunpack.c.l.b16 %v192
    %v507 = vunpack.c.h.b16 %v192
    %v508 = vunpack.c.l.b16 %v193
    %v509 = vunpack.c.h.b16 %v193
    %v510 = vunpack.c.l.b16 %v194
    %v511 = vunpack.c.h.b16 %v194
    %v512 = vunpack.c.l.b16 %v195
    %v513 = vunpack.c.h.b16 %v195
    %v514 = vunpack.c.l.b16 %v196
    %v515 = vunpack.c.h.b16 %v196
    %v516 = vunpack.c.l.b16 %v197
    %v517 = vunpack.c.h.b16 %v197
    %v518 = vunpack.c.l.b16 %v198
    %v519 = vunpack.c.h.b16 %v198
    %v520 = vunpack.c.l.b16 %v199
    %v521 = vunpack.c.h.b16 %v199
    %v522 = vunpack.c.l.b16 %v200
    %v523 = vunpack.c.h.b16 %v200
    %v524 = vunpack.c.l.b16 %v201
    %v525 = vunpack.c.h.b16 %v201
    %v526 = vunpack.c.l.b16 %v202
    %v527 = vunpack.c.h.b16 %v202
    %v528 = vunpack.c.l.b16 %v203
    %v529 = vunpack.c.h.b16 %v203
    %v530 = vunpack.c.l.b16 %v204
    %v531 = vunpack.c.h.b16 %v204
    %v532 = vunpack.c.l.b16 %v205
    %v533 = vunpack.c.h.b16 %v205
    %v534 = vunpack.c.l.b16 %v206
    %v535 = vunpack.c.h.b16 %v206
    %v536 = vunpack.c.l.b16 %v207
    %v537 = vunpack.c.h.b16 %v207
    %v538 = vunpack.c.l.b16 %v208
    %v539 = vunpack.c.h.b16 %v208
    %v540 = vunpack.c.l.b16 %v209
    %v541 = vunpack.c.h.b16 %v209
    %v542 = vunpack.c.l.b16 %v210
    %v543 = vunpack.c.h.b16 %v210
    %v544 = vunpack.c.l.b16 %v211
    %v545 = vunpack.c.h.b16 %v211
    %v546 = vunpack.c.l.b16 %v212
    %v547 = vunpack.c.h.b16 %v212
    %v548 = vunpack.c.l.b16 %v213
    %v549 = vunpack.c.h.b16 %v213
    %v550 = vunpack.c.l.b16 %v214
    %v551 = vunpack.c.h.b16 %v214
    %v552 = vunpack.c.l.b16 %v215
    %v553 = vunpack.c.h.b16 %v215
    %v554 = vunpack.c.l.b16 %v216
    %v555 = vunpack.c.h.b16 %v216
    %v556 = vunpack.c.l.b16 %v217
    %v557 = vunpack.c.h.b16 %v217
    %v558 = vunpack.c.l.b16 %v218
    %v559 = vunpack.c.h.b16 %v218
    %v560 = vunpack.c.l.b16 %v219
    %v561 = vunpack.c.h.b16 %v219
    %v562 = vunpack.c.l.b16 %v220
    %v563 = vunpack.c.h.b16 %v220
    %v564 = vunpack.c.l.b16 %v221
    %v565 = vunpack.c.h.b16 %v221
    %v566 = vunpack.c.l.b16 %v222
    %v567 = vunpack.c.h.b16 %v222
    %v568 = vunpack.c.l.b16 %v223
    %v569 = vunpack.c.h.b16 %v223
    %v570 = vunpack.c.l.b16 %v224
    %v571 = vunpack.c.h.b16 %v224
    %v572 = vunpack.c.l.b16 %v225
    %v573 = vunpack.c.h.b16 %v225
    %v574 = vunpack.c.l.b16 %v226
    %v575 = vunpack.c.h.b16 %v226
    %v576 = vunpack.c.l.b16 %v227
    %v577 = vunpack.c.h.b16 %v227
    %v578 = vunpack.c.l.b16 %v228
    %v579 = vunpack.c.h.b16 %v228
    %v580 = vunpack.c.l.b16 %v229
    %v581 = vunpack.c.h.b16 %v229
    %v582 = vunpack.c.l.b16 %v230
    %v583 = vunpack.c.h.b16 %v230
    %v584 = vunpack.c.l.b16 %v231
    %v585 = vunpack.c.h.b16 %v231
    %v586 = vunpack.c.l.b16 %v232
    %v587 = vunpack.c.h.b16 %v232
    %v588 = vunpack.c.l.b16 %v233
    %v589 = vunpack.c.h.b16 %v233
    %v590 = vunpack.c.l.b16 %v234
    %v591 = vunpack.c.h.b16 %v234
    %v592 = vunpack.c.l.b16 %v235
    %v593 = vunpack.c.h.b16 %v235
    %v594 = vunpack.c.l.b16 %v236
    %v595 = vunpack.c.h.b16 %v236
    %v596 = vunpack.c.l.b16 %v237
    %v597 = vunpack.c.h.b16 %v237
    %v598 = vunpack.c.l.b16 %v238
    %v599 = vunpack.c.h.b16 %v238
    %v600 = vunpack.c.l.b16 %v239
    %v601 = vunpack.c.h.b16 %v239
    %v602 = vunpack.c.l.b16 %v240
    %v603 = vunpack.c.h.b16 %v240
    %v604 = vunpack.c.l.b16 %v241
    %v605 = vunpack.c.h.b16 %v241
    %v606 = vunpack.c.l.b16 %v242
    %v607 = vunpack.c.h.b16 %v242
    %v608 = vunpack.c.l.b16 %v243
    %v609 = vunpack.c.h.b16 %v243
    %v610 = vunpack.c.l.b16 %v244
    %v611 = vunpack.c.h.b16 %v244
    %v612 = vunpack.c.l.b16 %v245
    %v613 = vunpack.c.h.b16 %v245
    %v614 = vunpack.c.l.b16 %v246
    %v615 = vunpack.c.h.b16 %v246
    %v616 = vunpack.c.l.b16 %v247
    %v617 = vunpack.c.h.b16 %v247
    %v618 = vunpack.c.l.b16 %v248
    %v619 = vunpack.c.h.b16 %v248
    %v620 = vunpack.c.l.b16 %v249
    %v621 = vunpack.c.h.b16 %v249
    %v622 = vunpack.c.l.b16 %v250
    %v623 = vunpack.c.h.b16 %v250
    %v624 = vunpack.c.l.b16 %v251
    %v625 = vunpack.c.h.b16 %v251
    %v626 = vunpack.c.l.b16 %v252
    %v627 = vunpack.c.h.b16 %v252
    %v628 = vunpack.c.l.b16 %v253
    %v629 = vunpack.c.h.b16 %v253
    %v630 = vunpack.c.l.b16 %v254
    %v631 = vunpack.c.h.b16 %v254
    %v632 = vunpack.c.l.b16 %v255
    %v633 = vunpack.c.h.b16 %v255
    %v634 = vunpack.c.l.b16 %v256
    %v635 = vunpack.c.h.b16 %v256
    %v636 = vunpack.c.l.b16 %v257
    %v637 = vunpack.c.h.b16 %v257
    %v638 = vunpack.c.l.b16 %v258
    %v639 = vunpack.c.h.b16 %v258
    %v640 = vunpack.c.l.b16 %v259
    %v641 = vunpack.c.h.b16 %v259
    %v642 = vunpack.c.l.b16 %v260
    %v643 = vunpack.c.h.b16 %v260
    %v644 = vunpack.c.l.b16 %v261
    %v645 = vunpack.c.h.b16 %v261
    %v646 = vunpack.c.l.b16 %v262
    %v647 = vunpack.c.h.b16 %v262
    %v648 = vunpack.c.l.b16 %v263
    %v649 = vunpack.c.h.b16 %v263
    %v650 = vunpack.c.l.b16 %v264
    %v651 = vunpack.c.h.b16 %v264
    %v652 = vunpack.c.l.b16 %v265
    %v653 = vunpack.c.h.b16 %v265
    %v654 = vunpack.c.l.b16 %v266
    %v655 = vunpack.c.h.b16 %v266
    %v656 = vunpack.c.l.b16 %v267
    %v657 = vunpack.c.h.b16 %v267
    %v658 = vunpack.c.l.b16 %v268
    %v659 = vunpack.c.h.b16 %v268
    %v660 = vunpack.c.l.b16 %v269
    %v661 = vunpack.c.h.b16 %v269
    %v662 = vunpack.c.l.b16 %v270
    %v663 = vunpack.c.h.b16 %v270
    %v664 = vunpack.c.l.b16 %v271
    %v665 = vunpack.c.h.b16 %v271
    %v666 = vunpack.c.l.b16 %v272
    %v667 = vunpack.c.h.b16 %v272
    %v668 = vunpack.c.l.b16 %v273
    %v669 = vunpack.c.h.b16 %v273
    %v670 = vunpack.c.l.b16 %v274
    %v671 = vunpack.c.h.b16 %v274
    %v672 = vunpack.c.l.b16 %v275
    %v673 = vunpack.c.h.b16 %v275
    %v674 = vunpack.c.l.b16 %v276
    %v675 = vunpack.c.h.b16 %v276
    %v676 = vunpack.c.l.b16 %v277
    %v677 = vunpack.c.h.b16 %v277
    %v678 = vunpack.c.l.b16 %v278
    %v679 = vunpack.c.h.b16 %v278
    %v680 = vunpack.c.l.b16 %v279
    %v681 = vunpack.c.h.b16 %v279
    %v682 = vunpack.c.l.b16 %v280
    %v683 = vunpack.c.h.b16 %v280
    %v684 = vunpack.c.l.b16 %v281
    %v685 = vunpack.c.h.b16 %v281
    %v686 = vpack.c.b16 %v438, %v430
    %v687 = vpack.c.b16 %v439, %v431
    %v688 = vpack.c.b16 %v440, %v432
    %v689 = vpack.c.b16 %v441, %v433
    %v690 = vpack.c.b16 %v442, %v434
    %v691 = vpack.c.b16 %v443, %v435
    %v692 = vpack.c.b16 %v444, %v436
    %v693 = vpack.c.b16 %v445, %v437
    %v694 = vpack.c.b16 %v454, %v446
    %v695 = vpack.c.b16 %v455, %v447
    %v696 = vpack.c.b16 %v456, %v448
    %v697 = vpack.c.b16 %v457, %v449
    %v698 = vpack.c.b16 %v458, %v450
    %v699 = vpack.c.b16 %v459, %v451
    %v700 = vpack.c.b16 %v460, %v452
    %v701 = vpack.c.b16 %v461, %v453
    %v702 = vpack.c.b16 %v470, %v462
    %v703 = vpack.c.b16 %v471, %v463
    %v704 = vpack.c.b16 %v472, %v464
    %v705 = vpack.c.b16 %v473, %v465
    %v706 = vpack.c.b16 %v474, %v466
    %v707 = vpack.c.b16 %v475, %v467
    %v708 = vpack.c.b16 %v476, %v468
    %v709 = vpack.c.b16 %v477, %v469
    %v710 = vpack.c.b16 %v486, %v478
    %v711 = vpack.c.b16 %v487, %v479
    %v712 = vpack.c.b16 %v488, %v480
    %v713 = vpack.c.b16 %v489, %v481
    %v714 = vpack.c.b16 %v490, %v482
    %v715 = vpack.c.b16 %v491, %v483
    %v716 = vpack.c.b16 %v492, %v484
    %v717 = vpack.c.b16 %v493, %v485
    %v718 = vpack.c.b16 %v502, %v494
    %v719 = vpack.c.b16 %v503, %v495
    %v720 = vpack.c.b16 %v504, %v496
    %v721 = vpack.c.b16 %v505, %v497
    %v722 = vpack.c.b16 %v506, %v498
    %v723 = vpack.c.b16 %v507, %v499
    %v724 = vpack.c.b16 %v508, %v500
    %v725 = vpack.c.b16 %v509, %v501
    %v726 = vpack.c.b16 %v518, %v510
    %v727 = vpack.c.b16 %v519, %v511
    %v728 = vpack.c.b16 %v520, %v512
    %v729 = vpack.c.b16 %v521, %v513
    %v730 = vpack.c.b16 %v522, %v514
    %v731 = vpack.c.b16 %v523, %v515
    %v732 = vpack.c.b16 %v524, %v516
    %v733 = vpack.c.b16 %v525, %v517
    %v734 = vpack.c.b16 %v534, %v526
    %v735 = vpack.c.b16 %v535, %v527
    %v736 = vpack.c.b16 %v536, %v528
    %v737 = vpack.c.b16 %v537, %v529
    %v738 = vpack.c.b16 %v538, %v530
    %v739 = vpack.c.b16 %v539, %v531
    %v740 = vpack.c.b16 %v540, %v532
    %v741 = vpack.c.b16 %v541, %v533
    %v742 = vpack.c.b16 %v550, %v542
    %v743 = vpack.c.b16 %v551, %v543
    %v744 = vpack.c.b16 %v552, %v544
    %v745 = vpack.c.b16 %v553, %v545
    %v746 = vpack.c.b16 %v554, %v546
    %v747 = vpack.c.b16 %v555, %v547
    %v748 = vpack.c.b16 %v556, %v548
    %v749 = vpack.c.b16 %v557, %v549
    %v750 = vpack.c.b16 %v566, %v558
    %v751 = vpack.c.b16 %v567, %v559
    %v752 = vpack.c.b16 %v568, %v560
    %v753 = vpack.c.b16 %v569, %v561
    %v754 = vpack.c.b16 %v570, %v562
    %v755 = vpack.c.b16 %v571, %v563
    %v756 = vpack.c.b16 %v572, %v564
    %v757 = vpack.c.b16 %v573, %v565
    %v758 = vpack.c.b16 %v582, %v574
    %v759 = vpack.c.b16 %v583, %v575
    %v760 = vpack.c.b16 %v584, %v576
    %v761 = vpack.c.b16 %v585, %v577
    %v762 = vpack.c.b16 %v586, %v578
    %v763 = vpack.c.b16 %v587, %v579
    %v764 = vpack.c.b16 %v588, %v580
    %v765 = vpack.c.b16 %v589, %v581
    %v766 = vpack.c.b16 %v598, %v590
    %v767 = vpack.c.b16 %v599, %v591
    %v768 = vpack.c.b16 %v600, %v592
    %v769 = vpack.c.b16 %v601, %v593
    %v770 = vpack.c.b16 %v602, %v594
    %v771 = vpack.c.b16 %v603, %v595
    %v772 = vpack.c.b16 %v604, %v596
    %v773 = vpack.c.b16 %v605, %v597
    %v774 = vpack.c.b16 %v614, %v606
    %v775 = vpack.c.b16 %v615, %v607
    %v776 = vpack.c.b16 %v616, %v608
    %v777 = vpack.c.b16 %v617, %v609
    %v778 = vpack.c.b16 %v618, %v610
    %v779 = vpack.c.b16 %v619, %v611
    %v780 = vpack.c.b16 %v620, %v612
    %v781 = vpack.c.b16 %v621, %v613
    %v782 = vpack.c.b16 %v630, %v622
    %v783 = vpack.c.b16 %v631, %v623
    %v784 = vpack.c.b16 %v632, %v624
    %v785 = vpack.c.b16 %v633, %v625
    %v786 = vpack.c.b16 %v634, %v626
    %v787 = vpack.c.b16 %v635, %v627
    %v788 = vpack.c.b16 %v636, %v628
    %v789 = vpack.c.b16 %v637, %v629
    %v790 = vpack.c.b16 %v646, %v638
    %v791 = vpack.c.b16 %v647, %v639
    %v792 = vpack.c.b16 %v648, %v640
    %v793 = vpack.c.b16 %v649, %v641
    %v794 = vpack.c.b16 %v650, %v642
    %v795 = vpack.c.b16 %v651, %v643
    %v796 = vpack.c.b16 %v652, %v644
    %v797 = vpack.c.b16 %v653, %v645
    %v798 = vpack.c.b16 %v662, %v654
    %v799 = vpack.c.b16 %v663, %v655
    %v800 = vpack.c.b16 %v664, %v656
    %v801 = vpack.c.b16 %v665, %v657
    %v802 = vpack.c.b16 %v666, %v658
    %v803 = vpack.c.b16 %v667, %v659
    %v804 = vpack.c.b16 %v668, %v660
    %v805 = vpack.c.b16 %v669, %v661
    %v806 = vpack.c.b16 %v678, %v670
    %v807 = vpack.c.b16 %v679, %v671
    %v808 = vpack.c.b16 %v680, %v672
    %v809 = vpack.c.b16 %v681, %v673
    %v810 = vpack.c.b16 %v682, %v674
    %v811 = vpack.c.b16 %v683, %v675
    %v812 = vpack.c.b16 %v684, %v676
    %v813 = vpack.c.b16 %v685, %v677
    %942 = vmatpush.bf16.msra.mxu0 %v742
    %943 = vmatpush.bf16.msra.mxu0 %v734
    %944 = vmatpush.bf16.msra.mxu0 %v726
    %945 = vmatpush.bf16.msra.mxu0 %v718
    %946 = vmatpush.bf16.msra.mxu0 %v710
    %947 = vmatpush.bf16.msra.mxu0 %v702
    %948 = vmatpush.bf16.msra.mxu0 %v694
    %949 = vmatpush.bf16.msra.mxu0 %v686
    %950 = vmatmul.bf16.gmra.mxu0 %v294
    %v951 = vpop.f32.mrf.mxu0
    %v952 = vadd.f32 0.0, %v951
    %v953 = vpop.f32.mrf.mxu0
    %v954 = vadd.f32 0.0, %v953
    %955 = vmatmul.bf16.gmra.mxu0 %v296
    %v956 = vpop.f32.mrf.mxu0
    %v957 = vadd.f32 0.0, %v956
    %v958 = vpop.f32.mrf.mxu0
    %v959 = vadd.f32 0.0, %v958
    %960 = vdwg.mxu0
    %961 = vmatpush.bf16.msra.mxu0 %v806
    %962 = vmatpush.bf16.msra.mxu0 %v798
    %963 = vmatpush.bf16.msra.mxu0 %v790
    %964 = vmatpush.bf16.msra.mxu0 %v782
    %965 = vmatpush.bf16.msra.mxu0 %v774
    %966 = vmatpush.bf16.msra.mxu0 %v766
    %967 = vmatpush.bf16.msra.mxu0 %v758
    %968 = vmatpush.bf16.msra.mxu0 %v750
    %969 = vmatmul.bf16.gmra.mxu0 %v295
    %v970 = vpop.f32.mrf.mxu0
    %v971 = vadd.f32 %v952, %v970
    %v972 = vpop.f32.mrf.mxu0
    %v973 = vadd.f32 %v954, %v972
    %974 = vmatmul.bf16.gmra.mxu0 %v297
    %v975 = vpop.f32.mrf.mxu0
    %v976 = vadd.f32 %v957, %v975
    %v977 = vpop.f32.mrf.mxu0
    %v978 = vadd.f32 %v959, %v977
    %979 = vdwg.mxu0
    %980 = vmatpush.bf16.msra.mxu0 %v743
    %981 = vmatpush.bf16.msra.mxu0 %v735
    %982 = vmatpush.bf16.msra.mxu0 %v727
    %983 = vmatpush.bf16.msra.mxu0 %v719
    %984 = vmatpush.bf16.msra.mxu0 %v711
    %985 = vmatpush.bf16.msra.mxu0 %v703
    %986 = vmatpush.bf16.msra.mxu0 %v695
    %987 = vmatpush.bf16.msra.mxu0 %v687
    %988 = vmatmul.bf16.gmra.mxu0 %v294
    %v989 = vpop.f32.mrf.mxu0
    %v990 = vadd.f32 0.0, %v989
    %v991 = vpop.f32.mrf.mxu0
    %v992 = vadd.f32 0.0, %v991
    %993 = vmatmul.bf16.gmra.mxu0 %v296
    %v994 = vpop.f32.mrf.mxu0
    %v995 = vadd.f32 0.0, %v994
    %v996 = vpop.f32.mrf.mxu0
    %v997 = vadd.f32 0.0, %v996
    %998 = vdwg.mxu0
    %999 = vmatpush.bf16.msra.mxu0 %v807
    %1000 = vmatpush.bf16.msra.mxu0 %v799
    %1001 = vmatpush.bf16.msra.mxu0 %v791
    %1002 = vmatpush.bf16.msra.mxu0 %v783
    %1003 = vmatpush.bf16.msra.mxu0 %v775
    %1004 = vmatpush.bf16.msra.mxu0 %v767
    %1005 = vmatpush.bf16.msra.mxu0 %v759
    %1006 = vmatpush.bf16.msra.mxu0 %v751
    %1007 = vmatmul.bf16.gmra.mxu0 %v295
    %v1008 = vpop.f32.mrf.mxu0
    %v1009 = vadd.f32 %v990, %v1008
    %v1010 = vpop.f32.mrf.mxu0
    %v1011 = vadd.f32 %v992, %v1010
    %1012 = vmatmul.bf16.gmra.mxu0 %v297
    %v1013 = vpop.f32.mrf.mxu0
    %v1014 = vadd.f32 %v995, %v1013
    %v1015 = vpop.f32.mrf.mxu0
    %v1016 = vadd.f32 %v997, %v1015
    %1017 = vdwg.mxu0
    %1018 = vmatpush.bf16.msra.mxu0 %v744
    %1019 = vmatpush.bf16.msra.mxu0 %v736
    %1020 = vmatpush.bf16.msra.mxu0 %v728
    %1021 = vmatpush.bf16.msra.mxu0 %v720
    %1022 = vmatpush.bf16.msra.mxu0 %v712
    %1023 = vmatpush.bf16.msra.mxu0 %v704
    %1024 = vmatpush.bf16.msra.mxu0 %v696
    %1025 = vmatpush.bf16.msra.mxu0 %v688
    %1026 = vmatmul.bf16.gmra.mxu0 %v294
    %v1027 = vpop.f32.mrf.mxu0
    %v1028 = vadd.f32 0.0, %v1027
    %v1029 = vpop.f32.mrf.mxu0
    %v1030 = vadd.f32 0.0, %v1029
    %1031 = vmatmul.bf16.gmra.mxu0 %v296
    %v1032 = vpop.f32.mrf.mxu0
    %v1033 = vadd.f32 0.0, %v1032
    %v1034 = vpop.f32.mrf.mxu0
    %v1035 = vadd.f32 0.0, %v1034
    %1036 = vdwg.mxu0
    %1037 = vmatpush.bf16.msra.mxu0 %v808
    %1038 = vmatpush.bf16.msra.mxu0 %v800
    %1039 = vmatpush.bf16.msra.mxu0 %v792
    %1040 = vmatpush.bf16.msra.mxu0 %v784
    %1041 = vmatpush.bf16.msra.mxu0 %v776
    %1042 = vmatpush.bf16.msra.mxu0 %v768
    %1043 = vmatpush.bf16.msra.mxu0 %v760
    %1044 = vmatpush.bf16.msra.mxu0 %v752
    %1045 = vmatmul.bf16.gmra.mxu0 %v295
    %v1046 = vpop.f32.mrf.mxu0
    %v1047 = vadd.f32 %v1028, %v1046
    %v1048 = vpop.f32.mrf.mxu0
    %v1049 = vadd.f32 %v1030, %v1048
    %1050 = vmatmul.bf16.gmra.mxu0 %v297
    %v1051 = vpop.f32.mrf.mxu0
    %v1052 = vadd.f32 %v1033, %v1051
    %v1053 = vpop.f32.mrf.mxu0
    %v1054 = vadd.f32 %v1035, %v1053
    %1055 = vdwg.mxu0
    %1056 = vmatpush.bf16.msra.mxu0 %v745
    %1057 = vmatpush.bf16.msra.mxu0 %v737
    %1058 = vmatpush.bf16.msra.mxu0 %v729
    %1059 = vmatpush.bf16.msra.mxu0 %v721
    %1060 = vmatpush.bf16.msra.mxu0 %v713
    %1061 = vmatpush.bf16.msra.mxu0 %v705
    %1062 = vmatpush.bf16.msra.mxu0 %v697
    %1063 = vmatpush.bf16.msra.mxu0 %v689
    %1064 = vmatmul.bf16.gmra.mxu0 %v294
    %v1065 = vpop.f32.mrf.mxu0
    %v1066 = vadd.f32 0.0, %v1065
    %v1067 = vpop.f32.mrf.mxu0
    %v1068 = vadd.f32 0.0, %v1067
    %1069 = vmatmul.bf16.gmra.mxu0 %v296
    %v1070 = vpop.f32.mrf.mxu0
    %v1071 = vadd.f32 0.0, %v1070
    %v1072 = vpop.f32.mrf.mxu0
    %v1073 = vadd.f32 0.0, %v1072
    %1074 = vdwg.mxu0
    %1075 = vmatpush.bf16.msra.mxu0 %v809
    %1076 = vmatpush.bf16.msra.mxu0 %v801
    %1077 = vmatpush.bf16.msra.mxu0 %v793
    %1078 = vmatpush.bf16.msra.mxu0 %v785
    %1079 = vmatpush.bf16.msra.mxu0 %v777
    %1080 = vmatpush.bf16.msra.mxu0 %v769
    %1081 = vmatpush.bf16.msra.mxu0 %v761
    %1082 = vmatpush.bf16.msra.mxu0 %v753
    %1083 = vmatmul.bf16.gmra.mxu0 %v295
    %v1084 = vpop.f32.mrf.mxu0
    %v1085 = vadd.f32 %v1066, %v1084
    %v1086 = vpop.f32.mrf.mxu0
    %v1087 = vadd.f32 %v1068, %v1086
    %1088 = vmatmul.bf16.gmra.mxu0 %v297
    %v1089 = vpop.f32.mrf.mxu0
    %v1090 = vadd.f32 %v1071, %v1089
    %v1091 = vpop.f32.mrf.mxu0
    %v1092 = vadd.f32 %v1073, %v1091
    %1093 = vdwg.mxu0
    %1094 = vmatpush.bf16.msra.mxu0 %v746
    %1095 = vmatpush.bf16.msra.mxu0 %v738
    %1096 = vmatpush.bf16.msra.mxu0 %v730
    %1097 = vmatpush.bf16.msra.mxu0 %v722
    %1098 = vmatpush.bf16.msra.mxu0 %v714
    %1099 = vmatpush.bf16.msra.mxu0 %v706
    %1100 = vmatpush.bf16.msra.mxu0 %v698
    %1101 = vmatpush.bf16.msra.mxu0 %v690
    %1102 = vmatmul.bf16.gmra.mxu0 %v294
    %v1103 = vpop.f32.mrf.mxu0
    %v1104 = vadd.f32 0.0, %v1103
    %v1105 = vpop.f32.mrf.mxu0
    %v1106 = vadd.f32 0.0, %v1105
    %1107 = vmatmul.bf16.gmra.mxu0 %v296
    %v1108 = vpop.f32.mrf.mxu0
    %v1109 = vadd.f32 0.0, %v1108
    %v1110 = vpop.f32.mrf.mxu0
    %v1111 = vadd.f32 0.0, %v1110
    %1112 = vdwg.mxu0
    %1113 = vmatpush.bf16.msra.mxu0 %v810
    %1114 = vmatpush.bf16.msra.mxu0 %v802
    %1115 = vmatpush.bf16.msra.mxu0 %v794
    %1116 = vmatpush.bf16.msra.mxu0 %v786
    %1117 = vmatpush.bf16.msra.mxu0 %v778
    %1118 = vmatpush.bf16.msra.mxu0 %v770
    %1119 = vmatpush.bf16.msra.mxu0 %v762
    %1120 = vmatpush.bf16.msra.mxu0 %v754
    %1121 = vmatmul.bf16.gmra.mxu0 %v295
    %v1122 = vpop.f32.mrf.mxu0
    %v1123 = vadd.f32 %v1104, %v1122
    %v1124 = vpop.f32.mrf.mxu0
    %v1125 = vadd.f32 %v1106, %v1124
    %1126 = vmatmul.bf16.gmra.mxu0 %v297
    %v1127 = vpop.f32.mrf.mxu0
    %v1128 = vadd.f32 %v1109, %v1127
    %v1129 = vpop.f32.mrf.mxu0
    %v1130 = vadd.f32 %v1111, %v1129
    %1131 = vdwg.mxu0
    %1132 = vmatpush.bf16.msra.mxu0 %v747
    %1133 = vmatpush.bf16.msra.mxu0 %v739
    %1134 = vmatpush.bf16.msra.mxu0 %v731
    %1135 = vmatpush.bf16.msra.mxu0 %v723
    %1136 = vmatpush.bf16.msra.mxu0 %v715
    %1137 = vmatpush.bf16.msra.mxu0 %v707
    %1138 = vmatpush.bf16.msra.mxu0 %v699
    %1139 = vmatpush.bf16.msra.mxu0 %v691
    %1140 = vmatmul.bf16.gmra.mxu0 %v294
    %v1141 = vpop.f32.mrf.mxu0
    %v1142 = vadd.f32 0.0, %v1141
    %v1143 = vpop.f32.mrf.mxu0
    %v1144 = vadd.f32 0.0, %v1143
    %1145 = vmatmul.bf16.gmra.mxu0 %v296
    %v1146 = vpop.f32.mrf.mxu0
    %v1147 = vadd.f32 0.0, %v1146
    %v1148 = vpop.f32.mrf.mxu0
    %v1149 = vadd.f32 0.0, %v1148
    %1150 = vdwg.mxu0
    %1151 = vmatpush.bf16.msra.mxu0 %v811
    %1152 = vmatpush.bf16.msra.mxu0 %v803
    %1153 = vmatpush.bf16.msra.mxu0 %v795
    %1154 = vmatpush.bf16.msra.mxu0 %v787
    %1155 = vmatpush.bf16.msra.mxu0 %v779
    %1156 = vmatpush.bf16.msra.mxu0 %v771
    %1157 = vmatpush.bf16.msra.mxu0 %v763
    %1158 = vmatpush.bf16.msra.mxu0 %v755
    %1159 = vmatmul.bf16.gmra.mxu0 %v295
    %v1160 = vpop.f32.mrf.mxu0
    %v1161 = vadd.f32 %v1142, %v1160
    %v1162 = vpop.f32.mrf.mxu0
    %v1163 = vadd.f32 %v1144, %v1162
    %1164 = vmatmul.bf16.gmra.mxu0 %v297
    %v1165 = vpop.f32.mrf.mxu0
    %v1166 = vadd.f32 %v1147, %v1165
    %v1167 = vpop.f32.mrf.mxu0
    %v1168 = vadd.f32 %v1149, %v1167
    %1169 = vdwg.mxu0
    %1170 = vmatpush.bf16.msra.mxu0 %v748
    %1171 = vmatpush.bf16.msra.mxu0 %v740
    %1172 = vmatpush.bf16.msra.mxu0 %v732
    %1173 = vmatpush.bf16.msra.mxu0 %v724
    %1174 = vmatpush.bf16.msra.mxu0 %v716
    %1175 = vmatpush.bf16.msra.mxu0 %v708
    %1176 = vmatpush.bf16.msra.mxu0 %v700
    %1177 = vmatpush.bf16.msra.mxu0 %v692
    %1178 = vmatmul.bf16.gmra.mxu0 %v294
    %v1179 = vpop.f32.mrf.mxu0
    %v1180 = vadd.f32 0.0, %v1179
    %v1181 = vpop.f32.mrf.mxu0
    %v1182 = vadd.f32 0.0, %v1181
    %1183 = vmatmul.bf16.gmra.mxu0 %v296
    %v1184 = vpop.f32.mrf.mxu0
    %v1185 = vadd.f32 0.0, %v1184
    %v1186 = vpop.f32.mrf.mxu0
    %v1187 = vadd.f32 0.0, %v1186
    %1188 = vdwg.mxu0
    %1189 = vmatpush.bf16.msra.mxu0 %v812
    %1190 = vmatpush.bf16.msra.mxu0 %v804
    %1191 = vmatpush.bf16.msra.mxu0 %v796
    %1192 = vmatpush.bf16.msra.mxu0 %v788
    %1193 = vmatpush.bf16.msra.mxu0 %v780
    %1194 = vmatpush.bf16.msra.mxu0 %v772
    %1195 = vmatpush.bf16.msra.mxu0 %v764
    %1196 = vmatpush.bf16.msra.mxu0 %v756
    %1197 = vmatmul.bf16.gmra.mxu0 %v295
    %v1198 = vpop.f32.mrf.mxu0
    %v1199 = vadd.f32 %v1180, %v1198
    %v1200 = vpop.f32.mrf.mxu0
    %v1201 = vadd.f32 %v1182, %v1200
    %1202 = vmatmul.bf16.gmra.mxu0 %v297
    %v1203 = vpop.f32.mrf.mxu0
    %v1204 = vadd.f32 %v1185, %v1203
    %v1205 = vpop.f32.mrf.mxu0
    %v1206 = vadd.f32 %v1187, %v1205
    %1207 = vdwg.mxu0
    %1208 = vmatpush.bf16.msra.mxu0 %v749
    %1209 = vmatpush.bf16.msra.mxu0 %v741
    %1210 = vmatpush.bf16.msra.mxu0 %v733
    %1211 = vmatpush.bf16.msra.mxu0 %v725
    %1212 = vmatpush.bf16.msra.mxu0 %v717
    %1213 = vmatpush.bf16.msra.mxu0 %v709
    %1214 = vmatpush.bf16.msra.mxu0 %v701
    %1215 = vmatpush.bf16.msra.mxu0 %v693
    %1216 = vmatmul.bf16.gmra.mxu0 %v294
    %v1217 = vpop.f32.mrf.mxu0
    %v1218 = vadd.f32 0.0, %v1217
    %v1219 = vpop.f32.mrf.mxu0
    %v1220 = vadd.f32 0.0, %v1219
    %1221 = vmatmul.bf16.gmra.mxu0 %v296
    %v1222 = vpop.f32.mrf.mxu0
    %v1223 = vadd.f32 0.0, %v1222
    %v1224 = vpop.f32.mrf.mxu0
    %v1225 = vadd.f32 0.0, %v1224
    %1226 = vdwg.mxu0
    %1227 = vmatpush.bf16.msra.mxu0 %v813
    %1228 = vmatpush.bf16.msra.mxu0 %v805
    %1229 = vmatpush.bf16.msra.mxu0 %v797
    %1230 = vmatpush.bf16.msra.mxu0 %v789
    %1231 = vmatpush.bf16.msra.mxu0 %v781
    %1232 = vmatpush.bf16.msra.mxu0 %v773
    %1233 = vmatpush.bf16.msra.mxu0 %v765
    %1234 = vmatpush.bf16.msra.mxu0 %v757
    %1235 = vmatmul.bf16.gmra.mxu0 %v295
    %v1236 = vpop.f32.mrf.mxu0
    %v1237 = vadd.f32 %v1218, %v1236
    %v1238 = vpop.f32.mrf.mxu0
    %v1239 = vadd.f32 %v1220, %v1238
    %1240 = vmatmul.bf16.gmra.mxu0 %v297
    %v1241 = vpop.f32.mrf.mxu0
    %v1242 = vadd.f32 %v1223, %v1241
    %v1243 = vpop.f32.mrf.mxu0
    %v1244 = vadd.f32 %v1225, %v1243
    %1245 = vdwg.mxu0
    %v1246 = vadd.f32 %v118, %v971
    %v1247 = vadd.f32 %v119, %v1009
    %v1248 = vadd.f32 %v120, %v1047
    %v1249 = vadd.f32 %v121, %v1085
    %v1250 = vadd.f32 %v122, %v1123
    %v1251 = vadd.f32 %v123, %v1161
    %v1252 = vadd.f32 %v124, %v1199
    %v1253 = vadd.f32 %v125, %v1237
    %v1254 = vadd.f32 %v126, %v973
    %v1255 = vadd.f32 %v127, %v1011
    %v1256 = vadd.f32 %v128, %v1049
    %v1257 = vadd.f32 %v129, %v1087
    %v1258 = vadd.f32 %v130, %v1125
    %v1259 = vadd.f32 %v131, %v1163
    %v1260 = vadd.f32 %v132, %v1201
    %v1261 = vadd.f32 %v133, %v1239
    %v1262 = vadd.f32 %v134, %v976
    %v1263 = vadd.f32 %v135, %v1014
    %v1264 = vadd.f32 %v136, %v1052
    %v1265 = vadd.f32 %v137, %v1090
    %v1266 = vadd.f32 %v138, %v1128
    %v1267 = vadd.f32 %v139, %v1166
    %v1268 = vadd.f32 %v140, %v1204
    %v1269 = vadd.f32 %v141, %v1242
    %v1270 = vadd.f32 %v142, %v978
    %v1271 = vadd.f32 %v143, %v1016
    %v1272 = vadd.f32 %v144, %v1054
    %v1273 = vadd.f32 %v145, %v1092
    %v1274 = vadd.f32 %v146, %v1130
    %v1275 = vadd.f32 %v147, %v1168
    %v1276 = vadd.f32 %v148, %v1206
    %v1277 = vadd.f32 %v149, %v1244
    %1278 = vst [vmem:[#allocation2] sm:$0xff] %v1246
    %1279 = vst [vmem:[#allocation2 + $0x8] sm:$0xff] %v1247
    %1280 = vst [vmem:[#allocation2 + $0x10] sm:$0xff] %v1248
    %1281 = vst [vmem:[#allocation2 + $0x18] sm:$0xff] %v1249
    %1282 = vst [vmem:[#allocation2 + $0x20] sm:$0xff] %v1250
    %1283 = vst [vmem:[#allocation2 + $0x28] sm:$0xff] %v1251
    %1284 = vst [vmem:[#allocation2 + $0x30] sm:$0xff] %v1252
    %1285 = vst [vmem:[#allocation2 + $0x38] sm:$0xff] %v1253
    %1286 = vst [vmem:[#allocation2 + $0x40] sm:$0xff] %v1254
    %1287 = vst [vmem:[#allocation2 + $0x48] sm:$0xff] %v1255
    %1288 = vst [vmem:[#allocation2 + $0x50] sm:$0xff] %v1256
    %1289 = vst [vmem:[#allocation2 + $0x58] sm:$0xff] %v1257
    %1290 = vst [vmem:[#allocation2 + $0x60] sm:$0xff] %v1258
    %1291 = vst [vmem:[#allocation2 + $0x68] sm:$0xff] %v1259
    %1292 = vst [vmem:[#allocation2 + $0x70] sm:$0xff] %v1260
    %1293 = vst [vmem:[#allocation2 + $0x78] sm:$0xff] %v1261
    %1294 = vst [vmem:[#allocation2 + $0x80] sm:$0xff] %v1262
    %1295 = vst [vmem:[#allocation2 + $0x88] sm:$0xff] %v1263
    %1296 = vst [vmem:[#allocation2 + $0x90] sm:$0xff] %v1264
    %1297 = vst [vmem:[#allocation2 + $0x98] sm:$0xff] %v1265
    %1298 = vst [vmem:[#allocation2 + $0xa0] sm:$0xff] %v1266
    %1299 = vst [vmem:[#allocation2 + $0xa8] sm:$0xff] %v1267
    %1300 = vst [vmem:[#allocation2 + $0xb0] sm:$0xff] %v1268
    %1301 = vst [vmem:[#allocation2 + $0xb8] sm:$0xff] %v1269
    %1302 = vst [vmem:[#allocation2 + $0xc0] sm:$0xff] %v1270
    %1303 = vst [vmem:[#allocation2 + $0xc8] sm:$0xff] %v1271
    %1304 = vst [vmem:[#allocation2 + $0xd0] sm:$0xff] %v1272
    %1305 = vst [vmem:[#allocation2 + $0xd8] sm:$0xff] %v1273
    %1306 = vst [vmem:[#allocation2 + $0xe0] sm:$0xff] %v1274
    %1307 = vst [vmem:[#allocation2 + $0xe8] sm:$0xff] %v1275
    %1308 = vst [vmem:[#allocation2 + $0xf0] sm:$0xff] %v1276
    %1309 = vst [vmem:[#allocation2 + $0xf8] sm:$0xff] %v1277
    // Predicated region
    $region42: #{tpu_custom_call.1} parent=1 // pred_check
      %p1310 = pneg %p82
    $region43: #{tpu_custom_call.1} parent=1 // pred_check_branch
      %1312 = sbr.rel (%p1310) target = $region45
    $region44: #{tpu_custom_call.1} parent=1 // pred_region
      %v1313 = vld [vmem:[#allocation2] sm:$0xff]
      %v1314 = vld [vmem:[#allocation2 + $0x8] sm:$0xff]
      %v1315 = vld [vmem:[#allocation2 + $0x10] sm:$0xff]
      %v1316 = vld [vmem:[#allocation2 + $0x18] sm:$0xff]
      %v1317 = vld [vmem:[#allocation2 + $0x20] sm:$0xff]
      %v1318 = vld [vmem:[#allocation2 + $0x28] sm:$0xff]
      %v1319 = vld [vmem:[#allocation2 + $0x30] sm:$0xff]
      %v1320 = vld [vmem:[#allocation2 + $0x38] sm:$0xff]
      %v1321 = vld [vmem:[#allocation2 + $0x40] sm:$0xff]
      %v1322 = vld [vmem:[#allocation2 + $0x48] sm:$0xff]
      %v1323 = vld [vmem:[#allocation2 + $0x50] sm:$0xff]
      %v1324 = vld [vmem:[#allocation2 + $0x58] sm:$0xff]
      %v1325 = vld [vmem:[#allocation2 + $0x60] sm:$0xff]
      %v1326 = vld [vmem:[#allocation2 + $0x68] sm:$0xff]
      %v1327 = vld [vmem:[#allocation2 + $0x70] sm:$0xff]
      %v1328 = vld [vmem:[#allocation2 + $0x78] sm:$0xff]
      %v1329 = vld [vmem:[#allocation2 + $0x80] sm:$0xff]
      %v1330 = vld [vmem:[#allocation2 + $0x88] sm:$0xff]
      %v1331 = vld [vmem:[#allocation2 + $0x90] sm:$0xff]
      %v1332 = vld [vmem:[#allocation2 + $0x98] sm:$0xff]
      %v1333 = vld [vmem:[#allocation2 + $0xa0] sm:$0xff]
      %v1334 = vld [vmem:[#allocation2 + $0xa8] sm:$0xff]
      %v1335 = vld [vmem:[#allocation2 + $0xb0] sm:$0xff]
      %v1336 = vld [vmem:[#allocation2 + $0xb8] sm:$0xff]
      %v1337 = vld [vmem:[#allocation2 + $0xc0] sm:$0xff]
      %v1338 = vld [vmem:[#allocation2 + $0xc8] sm:$0xff]
      %v1339 = vld [vmem:[#allocation2 + $0xd0] sm:$0xff]
      %v1340 = vld [vmem:[#allocation2 + $0xd8] sm:$0xff]
      %v1341 = vld [vmem:[#allocation2 + $0xe0] sm:$0xff]
      %v1342 = vld [vmem:[#allocation2 + $0xe8] sm:$0xff]
      %v1343 = vld [vmem:[#allocation2 + $0xf0] sm:$0xff]
      %v1344 = vld [vmem:[#allocation2 + $0xf8] sm:$0xff]
      %v1345 = vld [vmem:[#allocation8] sm:$0xff]
      %v1347 = vperm.slane %v1345, 0
      %v1348 = vperm.slane %v1345, 1
      %v1349 = vperm.slane %v1345, 2
      %v1350 = vperm.slane %v1345, 3
      %v1351 = vperm.slane %v1345, 4
      %v1352 = vperm.slane %v1345, 5
      %v1353 = vperm.slane %v1345, 6
      %v1354 = vperm.slane %v1345, 7
      %v1363 = vadd.f32 %v1313, %v1347
      %v1364 = vadd.f32 %v1314, %v1348
      %v1365 = vadd.f32 %v1315, %v1349
      %v1366 = vadd.f32 %v1316, %v1350
      %v1367 = vadd.f32 %v1317, %v1351
      %v1368 = vadd.f32 %v1318, %v1352
      %v1369 = vadd.f32 %v1319, %v1353
      %v1370 = vadd.f32 %v1320, %v1354
      %v1371 = vadd.f32 %v1321, %v1347
      %v1372 = vadd.f32 %v1322, %v1348
      %v1373 = vadd.f32 %v1323, %v1349
      %v1374 = vadd.f32 %v1324, %v1350
      %v1375 = vadd.f32 %v1325, %v1351
      %v1376 = vadd.f32 %v1326, %v1352
      %v1377 = vadd.f32 %v1327, %v1353
      %v1378 = vadd.f32 %v1328, %v1354
      %v1379 = vadd.f32 %v1329, %v1347
      %v1380 = vadd.f32 %v1330, %v1348
      %v1381 = vadd.f32 %v1331, %v1349
      %v1382 = vadd.f32 %v1332, %v1350
      %v1383 = vadd.f32 %v1333, %v1351
      %v1384 = vadd.f32 %v1334, %v1352
      %v1385 = vadd.f32 %v1335, %v1353
      %v1386 = vadd.f32 %v1336, %v1354
      %v1387 = vadd.f32 %v1337, %v1347
      %v1388 = vadd.f32 %v1338, %v1348
      %v1389 = vadd.f32 %v1339, %v1349
      %v1390 = vadd.f32 %v1340, %v1350
      %v1391 = vadd.f32 %v1341, %v1351
      %v1392 = vadd.f32 %v1342, %v1352
      %v1393 = vadd.f32 %v1343, %v1353
      %v1394 = vadd.f32 %v1344, %v1354
      %v1395 = vmax.f32 %v1363, 0.0
      %v1396 = vmax.f32 %v1364, 0.0
      %v1397 = vmax.f32 %v1365, 0.0
      %v1398 = vmax.f32 %v1366, 0.0
      %v1399 = vmax.f32 %v1367, 0.0
      %v1400 = vmax.f32 %v1368, 0.0
      %v1401 = vmax.f32 %v1369, 0.0
      %v1402 = vmax.f32 %v1370, 0.0
      %v1403 = vmax.f32 %v1371, 0.0
      %v1404 = vmax.f32 %v1372, 0.0
      %v1405 = vmax.f32 %v1373, 0.0
      %v1406 = vmax.f32 %v1374, 0.0
      %v1407 = vmax.f32 %v1375, 0.0
      %v1408 = vmax.f32 %v1376, 0.0
      %v1409 = vmax.f32 %v1377, 0.0
      %v1410 = vmax.f32 %v1378, 0.0
      %v1411 = vmax.f32 %v1379, 0.0
      %v1412 = vmax.f32 %v1380, 0.0
      %v1413 = vmax.f32 %v1381, 0.0
      %v1414 = vmax.f32 %v1382, 0.0
      %v1415 = vmax.f32 %v1383, 0.0
      %v1416 = vmax.f32 %v1384, 0.0
      %v1417 = vmax.f32 %v1385, 0.0
      %v1418 = vmax.f32 %v1386, 0.0
      %v1419 = vmax.f32 %v1387, 0.0
      %v1420 = vmax.f32 %v1388, 0.0
      %v1421 = vmax.f32 %v1389, 0.0
      %v1422 = vmax.f32 %v1390, 0.0
      %v1423 = vmax.f32 %v1391, 0.0
      %v1424 = vmax.f32 %v1392, 0.0
      %v1425 = vmax.f32 %v1393, 0.0
      %v1426 = vmax.f32 %v1394, 0.0
      %v1427 = vpack.c.bf16 %v1403, %v1395
      %v1428 = vpack.c.bf16 %v1404, %v1396
      %v1429 = vpack.c.bf16 %v1405, %v1397
      %v1430 = vpack.c.bf16 %v1406, %v1398
      %v1431 = vpack.c.bf16 %v1407, %v1399
      %v1432 = vpack.c.bf16 %v1408, %v1400
      %v1433 = vpack.c.bf16 %v1409, %v1401
      %v1434 = vpack.c.bf16 %v1410, %v1402
      %v1435 = vpack.c.bf16 %v1419, %v1411
      %v1436 = vpack.c.bf16 %v1420, %v1412
      %v1437 = vpack.c.bf16 %v1421, %v1413
      %v1438 = vpack.c.bf16 %v1422, %v1414
      %v1439 = vpack.c.bf16 %v1423, %v1415
      %v1440 = vpack.c.bf16 %v1424, %v1416
      %v1441 = vpack.c.bf16 %v1425, %v1417
      %v1442 = vpack.c.bf16 %v1426, %v1418
      %v1443 = vld [vmem:[#allocation9] sm:$0xf]
      %v1444 = vld [vmem:[#allocation9 + $0x4] sm:$0xf]
      %v1445 = vld [vmem:[#allocation9 + $0x8] sm:$0xf]
      %v1446 = vld [vmem:[#allocation9 + $0xc] sm:$0xf]
      %v1447 = vld [vmem:[#allocation9 + $0x10] sm:$0xf]
      %v1448 = vld [vmem:[#allocation9 + $0x14] sm:$0xf]
      %v1449 = vld [vmem:[#allocation9 + $0x18] sm:$0xf]
      %v1450 = vld [vmem:[#allocation9 + $0x1c] sm:$0xf]
      %v1451 = vld [vmem:[#allocation9 + $0x20] sm:$0xf]
      %v1452 = vld [vmem:[#allocation9 + $0x24] sm:$0xf]
      %v1453 = vld [vmem:[#allocation9 + $0x28] sm:$0xf]
      %v1454 = vld [vmem:[#allocation9 + $0x2c] sm:$0xf]
      %v1455 = vld [vmem:[#allocation9 + $0x30] sm:$0xf]
      %v1456 = vld [vmem:[#allocation9 + $0x34] sm:$0xf]
      %v1457 = vld [vmem:[#allocation9 + $0x38] sm:$0xf]
      %v1458 = vld [vmem:[#allocation9 + $0x3c] sm:$0xf]
      %v1459 = vld [vmem:[#allocation9 + $0x40] sm:$0xf]
      %v1460 = vld [vmem:[#allocation9 + $0x44] sm:$0xf]
      %v1461 = vld [vmem:[#allocation9 + $0x48] sm:$0xf]
      %v1462 = vld [vmem:[#allocation9 + $0x4c] sm:$0xf]
      %v1463 = vld [vmem:[#allocation9 + $0x50] sm:$0xf]
      %v1464 = vld [vmem:[#allocation9 + $0x54] sm:$0xf]
      %v1465 = vld [vmem:[#allocation9 + $0x58] sm:$0xf]
      %v1466 = vld [vmem:[#allocation9 + $0x5c] sm:$0xf]
      %v1467 = vld [vmem:[#allocation9 + $0x60] sm:$0xf]
      %v1468 = vld [vmem:[#allocation9 + $0x64] sm:$0xf]
      %v1469 = vld [vmem:[#allocation9 + $0x68] sm:$0xf]
      %v1470 = vld [vmem:[#allocation9 + $0x6c] sm:$0xf]
      %v1471 = vld [vmem:[#allocation9 + $0x70] sm:$0xf]
      %v1472 = vld [vmem:[#allocation9 + $0x74] sm:$0xf]
      %v1473 = vld [vmem:[#allocation9 + $0x78] sm:$0xf]
      %v1474 = vld [vmem:[#allocation9 + $0x7c] sm:$0xf]
      %v1475 = vld [vmem:[#allocation9 + $0x80] sm:$0xf]
      %v1476 = vld [vmem:[#allocation9 + $0x84] sm:$0xf]
      %v1477 = vld [vmem:[#allocation9 + $0x88] sm:$0xf]
      %v1478 = vld [vmem:[#allocation9 + $0x8c] sm:$0xf]
      %v1479 = vld [vmem:[#allocation9 + $0x90] sm:$0xf]
      %v1480 = vld [vmem:[#allocation9 + $0x94] sm:$0xf]
      %v1481 = vld [vmem:[#allocation9 + $0x98] sm:$0xf]
      %v1482 = vld [vmem:[#allocation9 + $0x9c] sm:$0xf]
      %v1483 = vld [vmem:[#allocation9 + $0xa0] sm:$0xf]
      %v1484 = vld [vmem:[#allocation9 + $0xa4] sm:$0xf]
      %v1485 = vld [vmem:[#allocation9 + $0xa8] sm:$0xf]
      %v1486 = vld [vmem:[#allocation9 + $0xac] sm:$0xf]
      %v1487 = vld [vmem:[#allocation9 + $0xb0] sm:$0xf]
      %v1488 = vld [vmem:[#allocation9 + $0xb4] sm:$0xf]
      %v1489 = vld [vmem:[#allocation9 + $0xb8] sm:$0xf]
      %v1490 = vld [vmem:[#allocation9 + $0xbc] sm:$0xf]
      %v1491 = vld [vmem:[#allocation9 + $0xc0] sm:$0xf]
      %v1492 = vld [vmem:[#allocation9 + $0xc4] sm:$0xf]
      %v1493 = vld [vmem:[#allocation9 + $0xc8] sm:$0xf]
      %v1494 = vld [vmem:[#allocation9 + $0xcc] sm:$0xf]
      %v1495 = vld [vmem:[#allocation9 + $0xd0] sm:$0xf]
      %v1496 = vld [vmem:[#allocation9 + $0xd4] sm:$0xf]
      %v1497 = vld [vmem:[#allocation9 + $0xd8] sm:$0xf]
      %v1498 = vld [vmem:[#allocation9 + $0xdc] sm:$0xf]
      %v1499 = vld [vmem:[#allocation9 + $0xe0] sm:$0xf]
      %v1500 = vld [vmem:[#allocation9 + $0xe4] sm:$0xf]
      %v1501 = vld [vmem:[#allocation9 + $0xe8] sm:$0xf]
      %v1502 = vld [vmem:[#allocation9 + $0xec] sm:$0xf]
      %v1503 = vld [vmem:[#allocation9 + $0xf0] sm:$0xf]
      %v1504 = vld [vmem:[#allocation9 + $0xf4] sm:$0xf]
      %v1505 = vld [vmem:[#allocation9 + $0xf8] sm:$0xf]
      %v1506 = vld [vmem:[#allocation9 + $0xfc] sm:$0xf]
      %v1507 = vld [vmem:[#allocation9 + $0x100] sm:$0xf]
      %v1508 = vld [vmem:[#allocation9 + $0x104] sm:$0xf]
      %v1509 = vld [vmem:[#allocation9 + $0x108] sm:$0xf]
      %v1510 = vld [vmem:[#allocation9 + $0x10c] sm:$0xf]
      %v1511 = vld [vmem:[#allocation9 + $0x110] sm:$0xf]
      %v1512 = vld [vmem:[#allocation9 + $0x114] sm:$0xf]
      %v1513 = vld [vmem:[#allocation9 + $0x118] sm:$0xf]
      %v1514 = vld [vmem:[#allocation9 + $0x11c] sm:$0xf]
      %v1515 = vld [vmem:[#allocation9 + $0x120] sm:$0xf]
      %v1516 = vld [vmem:[#allocation9 + $0x124] sm:$0xf]
      %v1517 = vld [vmem:[#allocation9 + $0x128] sm:$0xf]
      %v1518 = vld [vmem:[#allocation9 + $0x12c] sm:$0xf]
      %v1519 = vld [vmem:[#allocation9 + $0x130] sm:$0xf]
      %v1520 = vld [vmem:[#allocation9 + $0x134] sm:$0xf]
      %v1521 = vld [vmem:[#allocation9 + $0x138] sm:$0xf]
      %v1522 = vld [vmem:[#allocation9 + $0x13c] sm:$0xf]
      %v1523 = vld [vmem:[#allocation9 + $0x140] sm:$0xf]
      %v1524 = vld [vmem:[#allocation9 + $0x144] sm:$0xf]
      %v1525 = vld [vmem:[#allocation9 + $0x148] sm:$0xf]
      %v1526 = vld [vmem:[#allocation9 + $0x14c] sm:$0xf]
      %v1527 = vld [vmem:[#allocation9 + $0x150] sm:$0xf]
      %v1528 = vld [vmem:[#allocation9 + $0x154] sm:$0xf]
      %v1529 = vld [vmem:[#allocation9 + $0x158] sm:$0xf]
      %v1530 = vld [vmem:[#allocation9 + $0x15c] sm:$0xf]
      %v1531 = vld [vmem:[#allocation9 + $0x160] sm:$0xf]
      %v1532 = vld [vmem:[#allocation9 + $0x164] sm:$0xf]
      %v1533 = vld [vmem:[#allocation9 + $0x168] sm:$0xf]
      %v1534 = vld [vmem:[#allocation9 + $0x16c] sm:$0xf]
      %v1535 = vld [vmem:[#allocation9 + $0x170] sm:$0xf]
      %v1536 = vld [vmem:[#allocation9 + $0x174] sm:$0xf]
      %v1537 = vld [vmem:[#allocation9 + $0x178] sm:$0xf]
      %v1538 = vld [vmem:[#allocation9 + $0x17c] sm:$0xf]
      %v1539 = vld [vmem:[#allocation9 + $0x180] sm:$0xf]
      %v1540 = vld [vmem:[#allocation9 + $0x184] sm:$0xf]
      %v1541 = vld [vmem:[#allocation9 + $0x188] sm:$0xf]
      %v1542 = vld [vmem:[#allocation9 + $0x18c] sm:$0xf]
      %v1543 = vld [vmem:[#allocation9 + $0x190] sm:$0xf]
      %v1544 = vld [vmem:[#allocation9 + $0x194] sm:$0xf]
      %v1545 = vld [vmem:[#allocation9 + $0x198] sm:$0xf]
      %v1546 = vld [vmem:[#allocation9 + $0x19c] sm:$0xf]
      %v1547 = vld [vmem:[#allocation9 + $0x1a0] sm:$0xf]
      %v1548 = vld [vmem:[#allocation9 + $0x1a4] sm:$0xf]
      %v1549 = vld [vmem:[#allocation9 + $0x1a8] sm:$0xf]
      %v1550 = vld [vmem:[#allocation9 + $0x1ac] sm:$0xf]
      %v1551 = vld [vmem:[#allocation9 + $0x1b0] sm:$0xf]
      %v1552 = vld [vmem:[#allocation9 + $0x1b4] sm:$0xf]
      %v1553 = vld [vmem:[#allocation9 + $0x1b8] sm:$0xf]
      %v1554 = vld [vmem:[#allocation9 + $0x1bc] sm:$0xf]
      %v1555 = vld [vmem:[#allocation9 + $0x1c0] sm:$0xf]
      %v1556 = vld [vmem:[#allocation9 + $0x1c4] sm:$0xf]
      %v1557 = vld [vmem:[#allocation9 + $0x1c8] sm:$0xf]
      %v1558 = vld [vmem:[#allocation9 + $0x1cc] sm:$0xf]
      %v1559 = vld [vmem:[#allocation9 + $0x1d0] sm:$0xf]
      %v1560 = vld [vmem:[#allocation9 + $0x1d4] sm:$0xf]
      %v1561 = vld [vmem:[#allocation9 + $0x1d8] sm:$0xf]
      %v1562 = vld [vmem:[#allocation9 + $0x1dc] sm:$0xf]
      %v1563 = vld [vmem:[#allocation9 + $0x1e0] sm:$0xf]
      %v1564 = vld [vmem:[#allocation9 + $0x1e4] sm:$0xf]
      %v1565 = vld [vmem:[#allocation9 + $0x1e8] sm:$0xf]
      %v1566 = vld [vmem:[#allocation9 + $0x1ec] sm:$0xf]
      %v1567 = vld [vmem:[#allocation9 + $0x1f0] sm:$0xf]
      %v1568 = vld [vmem:[#allocation9 + $0x1f4] sm:$0xf]
      %v1569 = vld [vmem:[#allocation9 + $0x1f8] sm:$0xf]
      %v1570 = vld [vmem:[#allocation9 + $0x1fc] sm:$0xf]
      %v1571 = vld [vmem:[%s4] sm:$0x1]
      %v1573 = vperm.slane %v1571, 0
      %v1703 = vunpack.c.l.b16 %v1443
      %v1704 = vunpack.c.l.b16 %v1444
      %v1705 = vunpack.c.l.b16 %v1445
      %v1706 = vunpack.c.l.b16 %v1446
      %v1707 = vunpack.c.l.b16 %v1447
      %v1708 = vunpack.c.l.b16 %v1448
      %v1709 = vunpack.c.l.b16 %v1449
      %v1710 = vunpack.c.l.b16 %v1450
      %v1711 = vunpack.c.l.b16 %v1451
      %v1712 = vunpack.c.l.b16 %v1452
      %v1713 = vunpack.c.l.b16 %v1453
      %v1714 = vunpack.c.l.b16 %v1454
      %v1715 = vunpack.c.l.b16 %v1455
      %v1716 = vunpack.c.l.b16 %v1456
      %v1717 = vunpack.c.l.b16 %v1457
      %v1718 = vunpack.c.l.b16 %v1458
      %v1719 = vunpack.c.l.b16 %v1459
      %v1720 = vunpack.c.l.b16 %v1460
      %v1721 = vunpack.c.l.b16 %v1461
      %v1722 = vunpack.c.l.b16 %v1462
      %v1723 = vunpack.c.l.b16 %v1463
      %v1724 = vunpack.c.l.b16 %v1464
      %v1725 = vunpack.c.l.b16 %v1465
      %v1726 = vunpack.c.l.b16 %v1466
      %v1727 = vunpack.c.l.b16 %v1467
      %v1728 = vunpack.c.l.b16 %v1468
      %v1729 = vunpack.c.l.b16 %v1469
      %v1730 = vunpack.c.l.b16 %v1470
      %v1731 = vunpack.c.l.b16 %v1471
      %v1732 = vunpack.c.l.b16 %v1472
      %v1733 = vunpack.c.l.b16 %v1473
      %v1734 = vunpack.c.l.b16 %v1474
      %v1735 = vunpack.c.l.b16 %v1475
      %v1736 = vunpack.c.l.b16 %v1476
      %v1737 = vunpack.c.l.b16 %v1477
      %v1738 = vunpack.c.l.b16 %v1478
      %v1739 = vunpack.c.l.b16 %v1479
      %v1740 = vunpack.c.l.b16 %v1480
      %v1741 = vunpack.c.l.b16 %v1481
      %v1742 = vunpack.c.l.b16 %v1482
      %v1743 = vunpack.c.l.b16 %v1483
      %v1744 = vunpack.c.l.b16 %v1484
      %v1745 = vunpack.c.l.b16 %v1485
      %v1746 = vunpack.c.l.b16 %v1486
      %v1747 = vunpack.c.l.b16 %v1487
      %v1748 = vunpack.c.l.b16 %v1488
      %v1749 = vunpack.c.l.b16 %v1489
      %v1750 = vunpack.c.l.b16 %v1490
      %v1751 = vunpack.c.l.b16 %v1491
      %v1752 = vunpack.c.l.b16 %v1492
      %v1753 = vunpack.c.l.b16 %v1493
      %v1754 = vunpack.c.l.b16 %v1494
      %v1755 = vunpack.c.l.b16 %v1495
      %v1756 = vunpack.c.l.b16 %v1496
      %v1757 = vunpack.c.l.b16 %v1497
      %v1758 = vunpack.c.l.b16 %v1498
      %v1759 = vunpack.c.l.b16 %v1499
      %v1760 = vunpack.c.l.b16 %v1500
      %v1761 = vunpack.c.l.b16 %v1501
      %v1762 = vunpack.c.l.b16 %v1502
      %v1763 = vunpack.c.l.b16 %v1503
      %v1764 = vunpack.c.l.b16 %v1504
      %v1765 = vunpack.c.l.b16 %v1505
      %v1766 = vunpack.c.l.b16 %v1506
      %v1767 = vunpack.c.l.b16 %v1507
      %v1768 = vunpack.c.l.b16 %v1508
      %v1769 = vunpack.c.l.b16 %v1509
      %v1770 = vunpack.c.l.b16 %v1510
      %v1771 = vunpack.c.l.b16 %v1511
      %v1772 = vunpack.c.l.b16 %v1512
      %v1773 = vunpack.c.l.b16 %v1513
      %v1774 = vunpack.c.l.b16 %v1514
      %v1775 = vunpack.c.l.b16 %v1515
      %v1776 = vunpack.c.l.b16 %v1516
      %v1777 = vunpack.c.l.b16 %v1517
      %v1778 = vunpack.c.l.b16 %v1518
      %v1779 = vunpack.c.l.b16 %v1519
      %v1780 = vunpack.c.l.b16 %v1520
      %v1781 = vunpack.c.l.b16 %v1521
      %v1782 = vunpack.c.l.b16 %v1522
      %v1783 = vunpack.c.l.b16 %v1523
      %v1784 = vunpack.c.l.b16 %v1524
      %v1785 = vunpack.c.l.b16 %v1525
      %v1786 = vunpack.c.l.b16 %v1526
      %v1787 = vunpack.c.l.b16 %v1527
      %v1788 = vunpack.c.l.b16 %v1528
      %v1789 = vunpack.c.l.b16 %v1529
      %v1790 = vunpack.c.l.b16 %v1530
      %v1791 = vunpack.c.l.b16 %v1531
      %v1792 = vunpack.c.l.b16 %v1532
      %v1793 = vunpack.c.l.b16 %v1533
      %v1794 = vunpack.c.l.b16 %v1534
      %v1795 = vunpack.c.l.b16 %v1535
      %v1796 = vunpack.c.l.b16 %v1536
      %v1797 = vunpack.c.l.b16 %v1537
      %v1798 = vunpack.c.l.b16 %v1538
      %v1799 = vunpack.c.l.b16 %v1539
      %v1800 = vunpack.c.l.b16 %v1540
      %v1801 = vunpack.c.l.b16 %v1541
      %v1802 = vunpack.c.l.b16 %v1542
      %v1803 = vunpack.c.l.b16 %v1543
      %v1804 = vunpack.c.l.b16 %v1544
      %v1805 = vunpack.c.l.b16 %v1545
      %v1806 = vunpack.c.l.b16 %v1546
      %v1807 = vunpack.c.l.b16 %v1547
      %v1808 = vunpack.c.l.b16 %v1548
      %v1809 = vunpack.c.l.b16 %v1549
      %v1810 = vunpack.c.l.b16 %v1550
      %v1811 = vunpack.c.l.b16 %v1551
      %v1812 = vunpack.c.l.b16 %v1552
      %v1813 = vunpack.c.l.b16 %v1553
      %v1814 = vunpack.c.l.b16 %v1554
      %v1815 = vunpack.c.l.b16 %v1555
      %v1816 = vunpack.c.l.b16 %v1556
      %v1817 = vunpack.c.l.b16 %v1557
      %v1818 = vunpack.c.l.b16 %v1558
      %v1819 = vunpack.c.l.b16 %v1559
      %v1820 = vunpack.c.l.b16 %v1560
      %v1821 = vunpack.c.l.b16 %v1561
      %v1822 = vunpack.c.l.b16 %v1562
      %v1823 = vunpack.c.l.b16 %v1563
      %v1824 = vunpack.c.l.b16 %v1564
      %v1825 = vunpack.c.l.b16 %v1565
      %v1826 = vunpack.c.l.b16 %v1566
      %v1827 = vunpack.c.l.b16 %v1567
      %v1828 = vunpack.c.l.b16 %v1568
      %v1829 = vunpack.c.l.b16 %v1569
      %v1830 = vunpack.c.l.b16 %v1570
      %v1831 = vpack.c.b16 %v1704, %v1703
      %v1832 = vpack.c.b16 %v1706, %v1705
      %v1833 = vpack.c.b16 %v1708, %v1707
      %v1834 = vpack.c.b16 %v1710, %v1709
      %v1835 = vpack.c.b16 %v1712, %v1711
      %v1836 = vpack.c.b16 %v1714, %v1713
      %v1837 = vpack.c.b16 %v1716, %v1715
      %v1838 = vpack.c.b16 %v1718, %v1717
      %v1839 = vpack.c.b16 %v1720, %v1719
      %v1840 = vpack.c.b16 %v1722, %v1721
      %v1841 = vpack.c.b16 %v1724, %v1723
      %v1842 = vpack.c.b16 %v1726, %v1725
      %v1843 = vpack.c.b16 %v1728, %v1727
      %v1844 = vpack.c.b16 %v1730, %v1729
      %v1845 = vpack.c.b16 %v1732, %v1731
      %v1846 = vpack.c.b16 %v1734, %v1733
      %v1847 = vpack.c.b16 %v1736, %v1735
      %v1848 = vpack.c.b16 %v1738, %v1737
      %v1849 = vpack.c.b16 %v1740, %v1739
      %v1850 = vpack.c.b16 %v1742, %v1741
      %v1851 = vpack.c.b16 %v1744, %v1743
      %v1852 = vpack.c.b16 %v1746, %v1745
      %v1853 = vpack.c.b16 %v1748, %v1747
      %v1854 = vpack.c.b16 %v1750, %v1749
      %v1855 = vpack.c.b16 %v1752, %v1751
      %v1856 = vpack.c.b16 %v1754, %v1753
      %v1857 = vpack.c.b16 %v1756, %v1755
      %v1858 = vpack.c.b16 %v1758, %v1757
      %v1859 = vpack.c.b16 %v1760, %v1759
      %v1860 = vpack.c.b16 %v1762, %v1761
      %v1861 = vpack.c.b16 %v1764, %v1763
      %v1862 = vpack.c.b16 %v1766, %v1765
      %v1863 = vpack.c.b16 %v1768, %v1767
      %v1864 = vpack.c.b16 %v1770, %v1769
      %v1865 = vpack.c.b16 %v1772, %v1771
      %v1866 = vpack.c.b16 %v1774, %v1773
      %v1867 = vpack.c.b16 %v1776, %v1775
      %v1868 = vpack.c.b16 %v1778, %v1777
      %v1869 = vpack.c.b16 %v1780, %v1779
      %v1870 = vpack.c.b16 %v1782, %v1781
      %v1871 = vpack.c.b16 %v1784, %v1783
      %v1872 = vpack.c.b16 %v1786, %v1785
      %v1873 = vpack.c.b16 %v1788, %v1787
      %v1874 = vpack.c.b16 %v1790, %v1789
      %v1875 = vpack.c.b16 %v1792, %v1791
      %v1876 = vpack.c.b16 %v1794, %v1793
      %v1877 = vpack.c.b16 %v1796, %v1795
      %v1878 = vpack.c.b16 %v1798, %v1797
      %v1879 = vpack.c.b16 %v1800, %v1799
      %v1880 = vpack.c.b16 %v1802, %v1801
      %v1881 = vpack.c.b16 %v1804, %v1803
      %v1882 = vpack.c.b16 %v1806, %v1805
      %v1883 = vpack.c.b16 %v1808, %v1807
      %v1884 = vpack.c.b16 %v1810, %v1809
      %v1885 = vpack.c.b16 %v1812, %v1811
      %v1886 = vpack.c.b16 %v1814, %v1813
      %v1887 = vpack.c.b16 %v1816, %v1815
      %v1888 = vpack.c.b16 %v1818, %v1817
      %v1889 = vpack.c.b16 %v1820, %v1819
      %v1890 = vpack.c.b16 %v1822, %v1821
      %v1891 = vpack.c.b16 %v1824, %v1823
      %v1892 = vpack.c.b16 %v1826, %v1825
      %v1893 = vpack.c.b16 %v1828, %v1827
      %v1894 = vpack.c.b16 %v1830, %v1829
      %1959 = vmatpush.bf16.msra.mxu0 %v1838
      %1960 = vmatpush.bf16.msra.mxu0 %v1837
      %1961 = vmatpush.bf16.msra.mxu0 %v1836
      %1962 = vmatpush.bf16.msra.mxu0 %v1835
      %1963 = vmatpush.bf16.msra.mxu0 %v1834
      %1964 = vmatpush.bf16.msra.mxu0 %v1833
      %1965 = vmatpush.bf16.msra.mxu0 %v1832
      %1966 = vmatpush.bf16.msra.mxu0 %v1831
      %1967 = vmatmul.bf16.gmra.mxu0 %v1427
      %v1968 = vpop.f32.mrf.mxu0
      %v1969 = vadd.f32 %v1573, %v1968
      %v1970 = vpop.f32.mrf.mxu0
      %v1971 = vadd.f32 %v1573, %v1970
      %1972 = vmatmul.bf16.gmra.mxu0 %v1435
      %v1973 = vpop.f32.mrf.mxu0
      %v1974 = vadd.f32 %v1573, %v1973
      %v1975 = vpop.f32.mrf.mxu0
      %v1976 = vadd.f32 %v1573, %v1975
      %1977 = vdwg.mxu0
      %1978 = vmatpush.bf16.msra.mxu0 %v1846
      %1979 = vmatpush.bf16.msra.mxu0 %v1845
      %1980 = vmatpush.bf16.msra.mxu0 %v1844
      %1981 = vmatpush.bf16.msra.mxu0 %v1843
      %1982 = vmatpush.bf16.msra.mxu0 %v1842
      %1983 = vmatpush.bf16.msra.mxu0 %v1841
      %1984 = vmatpush.bf16.msra.mxu0 %v1840
      %1985 = vmatpush.bf16.msra.mxu0 %v1839
      %1986 = vmatmul.bf16.gmra.mxu0 %v1428
      %v1987 = vpop.f32.mrf.mxu0
      %v1988 = vadd.f32 %v1969, %v1987
      %v1989 = vpop.f32.mrf.mxu0
      %v1990 = vadd.f32 %v1971, %v1989
      %1991 = vmatmul.bf16.gmra.mxu0 %v1436
      %v1992 = vpop.f32.mrf.mxu0
      %v1993 = vadd.f32 %v1974, %v1992
      %v1994 = vpop.f32.mrf.mxu0
      %v1995 = vadd.f32 %v1976, %v1994
      %1996 = vdwg.mxu0
      %1997 = vmatpush.bf16.msra.mxu0 %v1854
      %1998 = vmatpush.bf16.msra.mxu0 %v1853
      %1999 = vmatpush.bf16.msra.mxu0 %v1852
      %2000 = vmatpush.bf16.msra.mxu0 %v1851
      %2001 = vmatpush.bf16.msra.mxu0 %v1850
      %2002 = vmatpush.bf16.msra.mxu0 %v1849
      %2003 = vmatpush.bf16.msra.mxu0 %v1848
      %2004 = vmatpush.bf16.msra.mxu0 %v1847
      %2005 = vmatmul.bf16.gmra.mxu0 %v1429
      %v2006 = vpop.f32.mrf.mxu0
      %v2007 = vadd.f32 %v1988, %v2006
      %v2008 = vpop.f32.mrf.mxu0
      %v2009 = vadd.f32 %v1990, %v2008
      %2010 = vmatmul.bf16.gmra.mxu0 %v1437
      %v2011 = vpop.f32.mrf.mxu0
      %v2012 = vadd.f32 %v1993, %v2011
      %v2013 = vpop.f32.mrf.mxu0
      %v2014 = vadd.f32 %v1995, %v2013
      %2015 = vdwg.mxu0
      %2016 = vmatpush.bf16.msra.mxu0 %v1862
      %2017 = vmatpush.bf16.msra.mxu0 %v1861
      %2018 = vmatpush.bf16.msra.mxu0 %v1860
      %2019 = vmatpush.bf16.msra.mxu0 %v1859
      %2020 = vmatpush.bf16.msra.mxu0 %v1858
      %2021 = vmatpush.bf16.msra.mxu0 %v1857
      %2022 = vmatpush.bf16.msra.mxu0 %v1856
      %2023 = vmatpush.bf16.msra.mxu0 %v1855
      %2024 = vmatmul.bf16.gmra.mxu0 %v1430
      %v2025 = vpop.f32.mrf.mxu0
      %v2026 = vadd.f32 %v2007, %v2025
      %v2027 = vpop.f32.mrf.mxu0
      %v2028 = vadd.f32 %v2009, %v2027
      %2029 = vmatmul.bf16.gmra.mxu0 %v1438
      %v2030 = vpop.f32.mrf.mxu0
      %v2031 = vadd.f32 %v2012, %v2030
      %v2032 = vpop.f32.mrf.mxu0
      %v2033 = vadd.f32 %v2014, %v2032
      %2034 = vdwg.mxu0
      %2035 = vmatpush.bf16.msra.mxu0 %v1870
      %2036 = vmatpush.bf16.msra.mxu0 %v1869
      %2037 = vmatpush.bf16.msra.mxu0 %v1868
      %2038 = vmatpush.bf16.msra.mxu0 %v1867
      %2039 = vmatpush.bf16.msra.mxu0 %v1866
      %2040 = vmatpush.bf16.msra.mxu0 %v1865
      %2041 = vmatpush.bf16.msra.mxu0 %v1864
      %2042 = vmatpush.bf16.msra.mxu0 %v1863
      %2043 = vmatmul.bf16.gmra.mxu0 %v1431
      %v2044 = vpop.f32.mrf.mxu0
      %v2045 = vadd.f32 %v2026, %v2044
      %v2046 = vpop.f32.mrf.mxu0
      %v2047 = vadd.f32 %v2028, %v2046
      %2048 = vmatmul.bf16.gmra.mxu0 %v1439
      %v2049 = vpop.f32.mrf.mxu0
      %v2050 = vadd.f32 %v2031, %v2049
      %v2051 = vpop.f32.mrf.mxu0
      %v2052 = vadd.f32 %v2033, %v2051
      %2053 = vdwg.mxu0
      %2054 = vmatpush.bf16.msra.mxu0 %v1878
      %2055 = vmatpush.bf16.msra.mxu0 %v1877
      %2056 = vmatpush.bf16.msra.mxu0 %v1876
      %2057 = vmatpush.bf16.msra.mxu0 %v1875
      %2058 = vmatpush.bf16.msra.mxu0 %v1874
      %2059 = vmatpush.bf16.msra.mxu0 %v1873
      %2060 = vmatpush.bf16.msra.mxu0 %v1872
      %2061 = vmatpush.bf16.msra.mxu0 %v1871
      %2062 = vmatmul.bf16.gmra.mxu0 %v1432
      %v2063 = vpop.f32.mrf.mxu0
      %v2064 = vadd.f32 %v2045, %v2063
      %v2065 = vpop.f32.mrf.mxu0
      %v2066 = vadd.f32 %v2047, %v2065
      %2067 = vmatmul.bf16.gmra.mxu0 %v1440
      %v2068 = vpop.f32.mrf.mxu0
      %v2069 = vadd.f32 %v2050, %v2068
      %v2070 = vpop.f32.mrf.mxu0
      %v2071 = vadd.f32 %v2052, %v2070
      %2072 = vdwg.mxu0
      %2073 = vmatpush.bf16.msra.mxu0 %v1886
      %2074 = vmatpush.bf16.msra.mxu0 %v1885
      %2075 = vmatpush.bf16.msra.mxu0 %v1884
      %2076 = vmatpush.bf16.msra.mxu0 %v1883
      %2077 = vmatpush.bf16.msra.mxu0 %v1882
      %2078 = vmatpush.bf16.msra.mxu0 %v1881
      %2079 = vmatpush.bf16.msra.mxu0 %v1880
      %2080 = vmatpush.bf16.msra.mxu0 %v1879
      %2081 = vmatmul.bf16.gmra.mxu0 %v1433
      %v2082 = vpop.f32.mrf.mxu0
      %v2083 = vadd.f32 %v2064, %v2082
      %v2084 = vpop.f32.mrf.mxu0
      %v2085 = vadd.f32 %v2066, %v2084
      %2086 = vmatmul.bf16.gmra.mxu0 %v1441
      %v2087 = vpop.f32.mrf.mxu0
      %v2088 = vadd.f32 %v2069, %v2087
      %v2089 = vpop.f32.mrf.mxu0
      %v2090 = vadd.f32 %v2071, %v2089
      %2091 = vdwg.mxu0
      %2092 = vmatpush.bf16.msra.mxu0 %v1894
      %2093 = vmatpush.bf16.msra.mxu0 %v1893
      %2094 = vmatpush.bf16.msra.mxu0 %v1892
      %2095 = vmatpush.bf16.msra.mxu0 %v1891
      %2096 = vmatpush.bf16.msra.mxu0 %v1890
      %2097 = vmatpush.bf16.msra.mxu0 %v1889
      %2098 = vmatpush.bf16.msra.mxu0 %v1888
      %2099 = vmatpush.bf16.msra.mxu0 %v1887
      %2100 = vmatmul.bf16.gmra.mxu0 %v1434
      %v2101 = vpop.f32.mrf.mxu0
      %v2102 = vadd.f32 %v2083, %v2101
      %v2103 = vpop.f32.mrf.mxu0
      %v2104 = vadd.f32 %v2085, %v2103
      %2105 = vmatmul.bf16.gmra.mxu0 %v1442
      %v2106 = vpop.f32.mrf.mxu0
      %v2107 = vadd.f32 %v2088, %v2106
      %v2108 = vpop.f32.mrf.mxu0
      %v2109 = vadd.f32 %v2090, %v2108
      %2110 = vdwg.mxu0
      %2111 = vst [vmem:[#allocation11] sm:$0xff] %v2102
      %2112 = vst [vmem:[#allocation11 + $0x8] sm:$0xff] %v2104
      %2113 = vst [vmem:[#allocation11 + $0x10] sm:$0xff] %v2107
      %2114 = vst [vmem:[#allocation11 + $0x18] sm:$0xff] %v2109
    $region45: #{tpu_custom_call.1} parent=1 // pred_fallthru
      _
    // Predicated region
    $region46: #{tpu_custom_call.1} parent=1 // pred_check
      _
    $region47: #{tpu_custom_call.1} parent=1 // pred_check_branch
      %2116 = sbr.rel (0) target = $region49
    $region48: #{tpu_custom_call.1} parent=1 // pred_region
      %2118 = vsyncadd [#allocation5], 0
      %s2119 = sshll.u32 [#allocation11], 4
      %s2120 = int_to_ptr.vmem [resolvable:$true] %s2119
      %s2121 = sshll.u32 %s5, 4
      %s2122 = int_to_ptr.hbm [resolvable:$true] %s2121
      %2127 = dma.vmem_to_hbm [thread:$0]  %s2120, 512, %s2122, [#allocation5], 128, 128, 8
    $region49: #{tpu_custom_call.1} parent=1 // pred_fallthru
      _
    // Predicated region
    $region50: #{tpu_custom_call.1} parent=1 // pred_check
      _
    $region51: #{tpu_custom_call.1} parent=1 // pred_check_branch
      %2129 = sbr.rel (0) target = $region53
    $region52: #{tpu_custom_call.1} parent=1 // pred_region
      %2131 = dma.done [#allocation5], 512
    $region53: #{tpu_custom_call.1} parent=1 // pred_fallthru
      _
    %2132 = vsyncpa [#allocation4], 1
    %2133 = vsyncpa [#allocation7], 1
    %2134 = vsyncpa [#allocation10], 1
    %2135 = vsyncpa [#allocation5], 1

</llo_original>
